<compile_context>
chip_gen: v7x
topology: tpu7x:2x2x1
jax: 0.10.0
libtpu: 0.0.40
codegen_flags: <defaults>
</compile_context>

<pallas_src>
from functools import partial

import jax
import jax.numpy as jnp
from jax.experimental import pallas as pl
from jax.experimental.pallas import tpu as pltpu


def _round_up(x: int, m: int) -> int:
    return (x + m - 1) // m * m


def _aspp_conv_bn_relu_kernel(x_ref, w_ref, scale_ref, bias_ref, o_ref,
                              *, KH, KW, dilation, Wp, Lgp):
    """One image per grid step: dilated KxK conv + folded BN + ReLU.

    x_ref:     (1, Cin, Lflat)     padded input, flattened row-major, bf16
    w_ref:     (KH*KW, Cout, Cin)  per-tap weights, bf16
    scale_ref: (Cout, 1)           folded BN scale, f32
    bias_ref:  (Cout, 1)           folded BN bias,  f32
    o_ref:     (1, Cout, Lgp)      output; Lgp is a multiple of 128 (lane-dense)
    """
    Cout = o_ref.shape[1]
    scale = scale_ref[...]          # hoisted: reused by every tap
    bias = bias_ref[...]

    acc = jnp.zeros((Cout, Lgp), jnp.float32)
    # Small fixed tap count with static lane offsets -> static unroll is fine;
    # the batch dimension is handled by the grid, not an in-kernel loop.
    t = 0
    for kh in range(KH):
        for kw in range(KW):
            s = kh * dilation * Wp + kw * dilation
            tap = x_ref[0, :, s:s + Lgp]          # (Cin, Lgp) bf16: in-VMEM "im2col"
            acc += jnp.dot(w_ref[t], tap, preferred_element_type=jnp.float32)
            t += 1

    y = acc * scale + bias                         # folded inference BN (f32 epilogue)
    o_ref[0] = jnp.maximum(y, 0.0).astype(o_ref.dtype)   # ReLU


def aspp_forward(x_nchw, weight_oihw, gamma, beta, running_mean, running_var,
                 *, padding, dilation, eps=1e-5, compute_dtype=jnp.bfloat16):
    """Pallas implementation of _ASPPModule.forward (NCHW in / NCHW out, stride=1)."""
    N, Cin, H, W = x_nchw.shape
    Cout, Cin_w, KH, KW = weight_oihw.shape
    assert Cin_w == Cin, (Cin_w, Cin)

    Hp, Wp = H + 2 * padding, W + 2 * padding
    Hout = Hp - dilation * (KH - 1)                # stride is fixed at 1
    Wout = Wp - dilation * (KW - 1)
    assert Hout > 0 and Wout > 0, (Hout, Wout)

    # Flattened-lane geometry: valid output lives at i*Wp + j (j < Wout);
    # pad the lane dim up to a multiple of 128 for unmasked stores.
    Lg = Hout * Wp
    Lgp = _round_up(Lg, 128)
    # Every tap slice [s, s + Lgp) must stay in bounds (max s = last tap).
    Lflat = _round_up((KH - 1) * dilation * Wp + (KW - 1) * dilation + Lgp, 128)

    # Cast to bf16 BEFORE any padding / reshaping (wrapper HBM traffic halves).
    xb = x_nchw.astype(compute_dtype)
    xp = jnp.pad(xb, ((0, 0), (0, 0), (padding, padding), (padding, padding)))
    xflat = xp.reshape(N, Cin, Hp * Wp)                       # free reshape
    xflat = jnp.pad(xflat, ((0, 0), (0, 0), (0, Lflat - Hp * Wp)))

    # OIHW -> (KH, KW, Cout, Cin) -> (KH*KW, Cout, Cin): per-tap GEMM lhs.
    w = jnp.transpose(weight_oihw, (2, 3, 0, 1)).reshape(KH * KW, Cout, Cin)
    w = w.astype(compute_dtype)

    # Fold BN (inference, running stats) into per-channel scale/bias (f32).
    g32 = gamma.astype(jnp.float32)
    scale = g32 / jnp.sqrt(running_var.astype(jnp.float32) + eps)
    bias = beta.astype(jnp.float32) - running_mean.astype(jnp.float32) * scale
    scale2 = scale.reshape(Cout, 1)
    bias2 = bias.reshape(Cout, 1)

    itemsize = jnp.dtype(compute_dtype).itemsize
    out_itemsize = jnp.dtype(x_nchw.dtype).itemsize
    cost = pl.CostEstimate(
        flops=2 * N * Cout * Cin * KH * KW * Hout * Wout,
        transcendentals=0,
        # Raw (non-duplicated) input bytes + weights + BN params + output.
        bytes_accessed=(N * Cin * Lflat * itemsize
                        + w.size * itemsize
                        + (Cout * 2) * 4
                        + N * Cout * Lgp * out_itemsize),
    )

    kernel = partial(_aspp_conv_bn_relu_kernel,
                     KH=KH, KW=KW, dilation=dilation, Wp=Wp, Lgp=Lgp)

    out = pl.pallas_call(
        kernel,
        out_shape=jax.ShapeDtypeStruct((N, Cout, Lgp), x_nchw.dtype),
        grid=(N,),
        in_specs=[
            pl.BlockSpec((1, Cin, Lflat), lambda i: (i, 0, 0)),
            pl.BlockSpec((KH * KW, Cout, Cin), lambda i: (0, 0, 0)),
            pl.BlockSpec((Cout, 1), lambda i: (0, 0)),
            pl.BlockSpec((Cout, 1), lambda i: (0, 0)),
        ],
        out_specs=pl.BlockSpec((1, Cout, Lgp), lambda i: (i, 0, 0)),
        compiler_params=pltpu.CompilerParams(
            dimension_semantics=("parallel",),
        ),
        cost_estimate=cost,
    )(xflat, w, scale2, bias2)

    # (N, Cout, Lgp) -> drop lane padding -> (N, Cout, Hout, Wp) -> drop the
    # Wp-Wout garbage columns per row.  Cheap wrapper-side slicing, no transposes.
    out = out[:, :, :Lg].reshape(N, Cout, Hout, Wp)[:, :, :, :Wout]
    return out


def _reference_forward(x, weight, gamma, beta, mean, var, padding, dilation, eps=1e-5):
    """Pure-JAX reference (matches PyTorch eval-mode forward, f32)."""
    y = jax.lax.conv_general_dilated(
        x, weight, window_strides=(1, 1),
        padding=((padding, padding), (padding, padding)),
        rhs_dilation=(dilation, dilation),
        dimension_numbers=("NCHW", "OIHW", "NCHW"),
    )
    s = (gamma / jnp.sqrt(var + eps)).reshape(1, -1, 1, 1)
    b = (beta - mean * gamma / jnp.sqrt(var + eps)).reshape(1, -1, 1, 1)
    return jnp.maximum(y * s + b, 0.0)


if __name__ == "__main__":
    # _ASPPModule(inChannel=4, outChannel=8, kernelSize=3, padding=2, dilation=2)
    N, Cin, H, W = 2, 4, 16, 16
    Cout, K, padding, dilation = 8, 3, 2, 2

    key = jax.random.PRNGKey(0)
    kx, kw, kg, kb, km, kv = jax.random.split(key, 6)

    x = jax.random.normal(kx, (N, Cin, H, W), dtype=jnp.float32)
    weight = 0.1 * jax.random.normal(kw, (Cout, Cin, K, K), dtype=jnp.float32)  # bias=False
    gamma = 1.0 + 0.1 * jax.random.normal(kg, (Cout,), dtype=jnp.float32)
    beta = 0.1 * jax.random.normal(kb, (Cout,), dtype=jnp.float32)
    running_mean = 0.1 * jax.random.normal(km, (Cout,), dtype=jnp.float32)
    running_var = jnp.abs(1.0 + 0.1 * jax.random.normal(kv, (Cout,), dtype=jnp.float32))

    fwd = jax.jit(partial(aspp_forward, padding=padding, dilation=dilation))
    out = fwd(x, weight, gamma, beta, running_mean, running_var)
    out = jax.block_until_ready(out)

    ref = _reference_forward(x, weight, gamma, beta, running_mean, running_var,
                             padding, dilation)
    assert out.shape == (N, Cout, H, W), out.shape
    # bf16 MXU operands (f32 accumulation): small contraction (Cin*K*K=36), so
    # 5e-2 is ample here; revisit the tolerance (or use f32 operands) for
    # production Cin~2048 contractions.
    max_err = float(jnp.max(jnp.abs(out - ref)))
    assert jnp.allclose(out, ref, atol=5e-2, rtol=5e-2), max_err

    print("KERNEL_OK")
</pallas_src>

<mosaic_0001>
module attributes {stable_mosaic.version = 11 : i64} {
  func.func @_aspp_conv_bn_relu_kernel(%arg0: i32, %arg1: memref<1x4x512xbf16, #tpu.memory_space<vmem>>, %arg2: memref<9x8x4xbf16, #tpu.memory_space<vmem>>, %arg3: memref<8x1xf32, #tpu.memory_space<vmem>>, %arg4: memref<8x1xf32, #tpu.memory_space<vmem>>, %arg5: memref<1x8x384xf32, #tpu.memory_space<vmem>>) attributes {dimension_semantics = [#tpu.dimension_semantics<parallel>], iteration_bounds = array<i64: 2>, scalar_prefetch = 0 : i64, scratch_operands = 0 : i64, tpu.core_type = #tpu.core_type<tc>, window_params = [{transform_indices = @transform_0, window_bounds = array<i64: 1, 4, 512>}, {pipeline_mode = #tpu.pipeline_mode<synchronous>, transform_indices = @transform_1, window_bounds = array<i64: 9, 8, 4>}, {pipeline_mode = #tpu.pipeline_mode<synchronous>, transform_indices = @transform_2, window_bounds = array<i64: 8, 1>}, {pipeline_mode = #tpu.pipeline_mode<synchronous>, transform_indices = @transform_3, window_bounds = array<i64: 8, 1>}, {transform_indices = @transform_4, window_bounds = array<i64: 1, 8, 384>}]} {
    %c0 = arith.constant 0 : index
    %c0_0 = arith.constant 0 : index
    %0 = vector.load %arg3[%c0, %c0_0] : memref<8x1xf32, #tpu.memory_space<vmem>>, vector<8x1xf32>
    %c0_1 = arith.constant 0 : index
    %c0_2 = arith.constant 0 : index
    %1 = vector.load %arg4[%c0_1, %c0_2] : memref<8x1xf32, #tpu.memory_space<vmem>>, vector<8x1xf32>
    %cst = arith.constant 0.000000e+00 : f32
    %2 = vector.broadcast %cst : f32 to vector<8x384xf32>
    %c0_3 = arith.constant 0 : index
    %c0_4 = arith.constant 0 : index
    %c0_5 = arith.constant 0 : index
    %3 = vector.load %arg1[%c0_3, %c0_4, %c0_5] : memref<1x4x512xbf16, #tpu.memory_space<vmem>>, vector<1x4x384xbf16>
    %4 = vector.shape_cast %3 : vector<1x4x384xbf16> to vector<4x384xbf16>
    %c0_6 = arith.constant 0 : index
    %c0_7 = arith.constant 0 : index
    %c0_8 = arith.constant 0 : index
    %5 = vector.load %arg2[%c0_6, %c0_7, %c0_8] : memref<9x8x4xbf16, #tpu.memory_space<vmem>>, vector<1x8x4xbf16>
    %6 = vector.shape_cast %5 : vector<1x8x4xbf16> to vector<8x4xbf16>
    %cst_9 = arith.constant dense<0.000000e+00> : vector<8x384xf32>
    %7 = tpu.matmul %6, %4, %cst_9 {dimension_numbers = #tpu.dot_dimension_numbers<[1], [0], [0], [1], [0, 0, 1, 1], [], []>} : vector<8x4xbf16>, vector<4x384xbf16>, vector<8x384xf32> -> vector<8x384xf32>
    %8 = arith.addf %2, %7 : vector<8x384xf32>
    %c0_10 = arith.constant 0 : index
    %c0_11 = arith.constant 0 : index
    %c2 = arith.constant 2 : index
    %9 = vector.load %arg1[%c0_10, %c0_11, %c2] : memref<1x4x512xbf16, #tpu.memory_space<vmem>>, vector<1x4x384xbf16>
    %10 = vector.shape_cast %9 : vector<1x4x384xbf16> to vector<4x384xbf16>
    %c1 = arith.constant 1 : index
    %c0_12 = arith.constant 0 : index
    %c0_13 = arith.constant 0 : index
    %11 = vector.load %arg2[%c1, %c0_12, %c0_13] : memref<9x8x4xbf16, #tpu.memory_space<vmem>>, vector<1x8x4xbf16>
    %12 = vector.shape_cast %11 : vector<1x8x4xbf16> to vector<8x4xbf16>
    %cst_14 = arith.constant dense<0.000000e+00> : vector<8x384xf32>
    %13 = tpu.matmul %12, %10, %cst_14 {dimension_numbers = #tpu.dot_dimension_numbers<[1], [0], [0], [1], [0, 0, 1, 1], [], []>} : vector<8x4xbf16>, vector<4x384xbf16>, vector<8x384xf32> -> vector<8x384xf32>
    %14 = arith.addf %8, %13 : vector<8x384xf32>
    %c0_15 = arith.constant 0 : index
    %c0_16 = arith.constant 0 : index
    %c4 = arith.constant 4 : index
    %15 = vector.load %arg1[%c0_15, %c0_16, %c4] : memref<1x4x512xbf16, #tpu.memory_space<vmem>>, vector<1x4x384xbf16>
    %16 = vector.shape_cast %15 : vector<1x4x384xbf16> to vector<4x384xbf16>
    %c2_17 = arith.constant 2 : index
    %c0_18 = arith.constant 0 : index
    %c0_19 = arith.constant 0 : index
    %17 = vector.load %arg2[%c2_17, %c0_18, %c0_19] : memref<9x8x4xbf16, #tpu.memory_space<vmem>>, vector<1x8x4xbf16>
    %18 = vector.shape_cast %17 : vector<1x8x4xbf16> to vector<8x4xbf16>
    %cst_20 = arith.constant dense<0.000000e+00> : vector<8x384xf32>
    %19 = tpu.matmul %18, %16, %cst_20 {dimension_numbers = #tpu.dot_dimension_numbers<[1], [0], [0], [1], [0, 0, 1, 1], [], []>} : vector<8x4xbf16>, vector<4x384xbf16>, vector<8x384xf32> -> vector<8x384xf32>
    %20 = arith.addf %14, %19 : vector<8x384xf32>
    %c0_21 = arith.constant 0 : index
    %c0_22 = arith.constant 0 : index
    %c40 = arith.constant 40 : index
    %21 = vector.load %arg1[%c0_21, %c0_22, %c40] : memref<1x4x512xbf16, #tpu.memory_space<vmem>>, vector<1x4x384xbf16>
    %22 = vector.shape_cast %21 : vector<1x4x384xbf16> to vector<4x384xbf16>
    %c3 = arith.constant 3 : index
    %c0_23 = arith.constant 0 : index
    %c0_24 = arith.constant 0 : index
    %23 = vector.load %arg2[%c3, %c0_23, %c0_24] : memref<9x8x4xbf16, #tpu.memory_space<vmem>>, vector<1x8x4xbf16>
    %24 = vector.shape_cast %23 : vector<1x8x4xbf16> to vector<8x4xbf16>
    %cst_25 = arith.constant dense<0.000000e+00> : vector<8x384xf32>
    %25 = tpu.matmul %24, %22, %cst_25 {dimension_numbers = #tpu.dot_dimension_numbers<[1], [0], [0], [1], [0, 0, 1, 1], [], []>} : vector<8x4xbf16>, vector<4x384xbf16>, vector<8x384xf32> -> vector<8x384xf32>
    %26 = arith.addf %20, %25 : vector<8x384xf32>
    %c0_26 = arith.constant 0 : index
    %c0_27 = arith.constant 0 : index
    %c42 = arith.constant 42 : index
    %27 = vector.load %arg1[%c0_26, %c0_27, %c42] : memref<1x4x512xbf16, #tpu.memory_space<vmem>>, vector<1x4x384xbf16>
    %28 = vector.shape_cast %27 : vector<1x4x384xbf16> to vector<4x384xbf16>
    %c4_28 = arith.constant 4 : index
    %c0_29 = arith.constant 0 : index
    %c0_30 = arith.constant 0 : index
    %29 = vector.load %arg2[%c4_28, %c0_29, %c0_30] : memref<9x8x4xbf16, #tpu.memory_space<vmem>>, vector<1x8x4xbf16>
    %30 = vector.shape_cast %29 : vector<1x8x4xbf16> to vector<8x4xbf16>
    %cst_31 = arith.constant dense<0.000000e+00> : vector<8x384xf32>
    %31 = tpu.matmul %30, %28, %cst_31 {dimension_numbers = #tpu.dot_dimension_numbers<[1], [0], [0], [1], [0, 0, 1, 1], [], []>} : vector<8x4xbf16>, vector<4x384xbf16>, vector<8x384xf32> -> vector<8x384xf32>
    %32 = arith.addf %26, %31 : vector<8x384xf32>
    %c0_32 = arith.constant 0 : index
    %c0_33 = arith.constant 0 : index
    %c44 = arith.constant 44 : index
    %33 = vector.load %arg1[%c0_32, %c0_33, %c44] : memref<1x4x512xbf16, #tpu.memory_space<vmem>>, vector<1x4x384xbf16>
    %34 = vector.shape_cast %33 : vector<1x4x384xbf16> to vector<4x384xbf16>
    %c5 = arith.constant 5 : index
    %c0_34 = arith.constant 0 : index
    %c0_35 = arith.constant 0 : index
    %35 = vector.load %arg2[%c5, %c0_34, %c0_35] : memref<9x8x4xbf16, #tpu.memory_space<vmem>>, vector<1x8x4xbf16>
    %36 = vector.shape_cast %35 : vector<1x8x4xbf16> to vector<8x4xbf16>
    %cst_36 = arith.constant dense<0.000000e+00> : vector<8x384xf32>
    %37 = tpu.matmul %36, %34, %cst_36 {dimension_numbers = #tpu.dot_dimension_numbers<[1], [0], [0], [1], [0, 0, 1, 1], [], []>} : vector<8x4xbf16>, vector<4x384xbf16>, vector<8x384xf32> -> vector<8x384xf32>
    %38 = arith.addf %32, %37 : vector<8x384xf32>
    %c0_37 = arith.constant 0 : index
    %c0_38 = arith.constant 0 : index
    %c80 = arith.constant 80 : index
    %39 = vector.load %arg1[%c0_37, %c0_38, %c80] : memref<1x4x512xbf16, #tpu.memory_space<vmem>>, vector<1x4x384xbf16>
    %40 = vector.shape_cast %39 : vector<1x4x384xbf16> to vector<4x384xbf16>
    %c6 = arith.constant 6 : index
    %c0_39 = arith.constant 0 : index
    %c0_40 = arith.constant 0 : index
    %41 = vector.load %arg2[%c6, %c0_39, %c0_40] : memref<9x8x4xbf16, #tpu.memory_space<vmem>>, vector<1x8x4xbf16>
    %42 = vector.shape_cast %41 : vector<1x8x4xbf16> to vector<8x4xbf16>
    %cst_41 = arith.constant dense<0.000000e+00> : vector<8x384xf32>
    %43 = tpu.matmul %42, %40, %cst_41 {dimension_numbers = #tpu.dot_dimension_numbers<[1], [0], [0], [1], [0, 0, 1, 1], [], []>} : vector<8x4xbf16>, vector<4x384xbf16>, vector<8x384xf32> -> vector<8x384xf32>
    %44 = arith.addf %38, %43 : vector<8x384xf32>
    %c0_42 = arith.constant 0 : index
    %c0_43 = arith.constant 0 : index
    %c82 = arith.constant 82 : index
    %45 = vector.load %arg1[%c0_42, %c0_43, %c82] : memref<1x4x512xbf16, #tpu.memory_space<vmem>>, vector<1x4x384xbf16>
    %46 = vector.shape_cast %45 : vector<1x4x384xbf16> to vector<4x384xbf16>
    %c7 = arith.constant 7 : index
    %c0_44 = arith.constant 0 : index
    %c0_45 = arith.constant 0 : index
    %47 = vector.load %arg2[%c7, %c0_44, %c0_45] : memref<9x8x4xbf16, #tpu.memory_space<vmem>>, vector<1x8x4xbf16>
    %48 = vector.shape_cast %47 : vector<1x8x4xbf16> to vector<8x4xbf16>
    %cst_46 = arith.constant dense<0.000000e+00> : vector<8x384xf32>
    %49 = tpu.matmul %48, %46, %cst_46 {dimension_numbers = #tpu.dot_dimension_numbers<[1], [0], [0], [1], [0, 0, 1, 1], [], []>} : vector<8x4xbf16>, vector<4x384xbf16>, vector<8x384xf32> -> vector<8x384xf32>
    %50 = arith.addf %44, %49 : vector<8x384xf32>
    %c0_47 = arith.constant 0 : index
    %c0_48 = arith.constant 0 : index
    %c84 = arith.constant 84 : index
    %51 = vector.load %arg1[%c0_47, %c0_48, %c84] : memref<1x4x512xbf16, #tpu.memory_space<vmem>>, vector<1x4x384xbf16>
    %52 = vector.shape_cast %51 : vector<1x4x384xbf16> to vector<4x384xbf16>
    %c8 = arith.constant 8 : index
    %c0_49 = arith.constant 0 : index
    %c0_50 = arith.constant 0 : index
    %53 = vector.load %arg2[%c8, %c0_49, %c0_50] : memref<9x8x4xbf16, #tpu.memory_space<vmem>>, vector<1x8x4xbf16>
    %54 = vector.shape_cast %53 : vector<1x8x4xbf16> to vector<8x4xbf16>
    %cst_51 = arith.constant dense<0.000000e+00> : vector<8x384xf32>
    %55 = tpu.matmul %54, %52, %cst_51 {dimension_numbers = #tpu.dot_dimension_numbers<[1], [0], [0], [1], [0, 0, 1, 1], [], []>} : vector<8x4xbf16>, vector<4x384xbf16>, vector<8x384xf32> -> vector<8x384xf32>
    %56 = arith.addf %50, %55 : vector<8x384xf32>
    %57 = vector.broadcast %0 : vector<8x1xf32> to vector<8x384xf32>
    %58 = arith.mulf %56, %57 : vector<8x384xf32>
    %59 = vector.broadcast %1 : vector<8x1xf32> to vector<8x384xf32>
    %60 = arith.addf %58, %59 : vector<8x384xf32>
    %cst_52 = arith.constant 0.000000e+00 : f32
    %61 = vector.broadcast %cst_52 : f32 to vector<8x384xf32>
    %62 = arith.maximumf %60, %61 : vector<8x384xf32>
    %c0_53 = arith.constant 0 : index
    %c0_54 = arith.constant 0 : index
    %c0_55 = arith.constant 0 : index
    %63 = vector.load %arg5[%c0_53, %c0_54, %c0_55] : memref<1x8x384xf32, #tpu.memory_space<vmem>>, vector<1x8x384xf32>
    %64 = vector.shape_cast %63 : vector<1x8x384xf32> to vector<8x384xf32>
    %65 = vector.shape_cast %62 : vector<8x384xf32> to vector<1x8x384xf32>
    tpu.vector_store %arg5[%c0_53, %c0_54, %c0_55], %65 {strides = array<i32>} : memref<1x8x384xf32, #tpu.memory_space<vmem>>, vector<1x8x384xf32>,
    return
  }
  func.func @transform_0(%arg0: i32) -> (i32, i32, i32) {
    %c0_i32 = arith.constant 0 : i32
    %c0_i32_0 = arith.constant 0 : i32
    %c0_i32_1 = arith.constant 0 : i32
    return %arg0, %c0_i32, %c0_i32_0 : i32, i32, i32
  }
  func.func @transform_1(%arg0: i32) -> (i32, i32, i32) {
    %c0_i32 = arith.constant 0 : i32
    %c0_i32_0 = arith.constant 0 : i32
    %c0_i32_1 = arith.constant 0 : i32
    %c0_i32_2 = arith.constant 0 : i32
    return %c0_i32, %c0_i32_0, %c0_i32_1 : i32, i32, i32
  }
  func.func @transform_2(%arg0: i32) -> (i32, i32) {
    %c0_i32 = arith.constant 0 : i32
    %c0_i32_0 = arith.constant 0 : i32
    %c0_i32_1 = arith.constant 0 : i32
    return %c0_i32, %c0_i32_0 : i32, i32
  }
  func.func @transform_3(%arg0: i32) -> (i32, i32) {
    %c0_i32 = arith.constant 0 : i32
    %c0_i32_0 = arith.constant 0 : i32
    %c0_i32_1 = arith.constant 0 : i32
    return %c0_i32, %c0_i32_0 : i32, i32
  }
  func.func @transform_4(%arg0: i32) -> (i32, i32, i32) {
    %c0_i32 = arith.constant 0 : i32
    %c0_i32_0 = arith.constant 0 : i32
    %c0_i32_1 = arith.constant 0 : i32
    return %arg0, %c0_i32, %c0_i32_0 : i32, i32, i32
  }
}

</mosaic_0001>

<llo_original>
// kernel: aspp_forward.1
$region0: #{aspp_forward.1}
  #allocation0 [shape = 'u32[]', space=smem, size = 0x4, offset = 0x4, fixed_abs, tag = 'smem constant byte address 0x4 - core index']
  #allocation1 [shape = 'u32[144,128]{1,0:T(1,128)}', space=vmem, size = 0x12000, scoped, tag = 'internal scratch']
  %s0 = inlined_call_operand.vmem [shape: bf16[2,4,512], index: 0, kind: input, shape index: {}]
  %s1 = inlined_call_operand.vmem [shape: bf16[9,8,4], index: 1, kind: input, shape index: {}]
  %s2 = inlined_call_operand.vmem [shape: f32[8,1], index: 2, kind: input, shape index: {}]
  %s3 = inlined_call_operand.vmem [shape: f32[8,1], index: 3, kind: input, shape index: {}]
  %s4 = inlined_call_operand.vmem [shape: f32[2,8,384], index: 4, kind: output, shape index: {}]
  %s5 = sld [smem:[#allocation0]]
  $region49: #{aspp_forward.1} parent=0
    _
  %s7 = ssub.s32 1, %s5
  %s8 = scalar_select 0, %s7, %s5
  loop: start=0, step=1, limit=4
  $region2: #{aspp_forward.1} parent=0 // loop_pre_header
    _
  $region3: #{aspp_forward.1} parent=0 // loop_header
    %s10 = sphi 0, %s14
    %p11 = scmp.ge.s32.totalorder %s10, 4
    %s20 = sphi 0, %s22
    %s23 = sphi 0, %s20
    %s24 = sphi 0, %s23
    %s40 = sphi 0, %s24
    %s44 = sphi 0, %s44
    %s46 = sphi 0, %s44
    %s47 = sphi 0, %s46
    %s61 = sphi 0, %s47
    %s65 = sphi 0, %s65
    %s67 = sphi 0, %s65
    %s68 = sphi 0, %s67
    %s82 = sphi 0, %s68
    %s86 = sphi 0, %s86
    %s88 = sphi 0, %s86
    %s89 = sphi 0, %s88
    %s103 = sphi 0, %s89
    %s109 = sphi 0, %s111
    %s112 = sphi 0, %s109
    %s113 = sphi 0, %s112
    %s129 = sphi 0, %s113
  $region4: #{aspp_forward.1} parent=0 // loop_header_branch
    %13 = sbr.rel (%p11) target = $region8
  $region5: #{aspp_forward.1} parent=0 // loop_body
    %s15 = ssub.s32 %s10, 1
    %s16 = ssub.s32 %s10, 2
    %s17 = sadd.s32 %s10, 1
    %s18 = ssub.s32 %s10, %s17
    %p19 = scmp.eq.s32.totalorder %s18, 0
    %s21 = sadd.s32 %s20, 1
    %s22 = scalar_select %p19, %s20, %s21
    %p25 = pneg %p19
    %p26 = scmp.eq.s32.totalorder %s10, 1
    %p27 = por %p25, %p26
    %p28 = scmp.ne.s32.totalorder %s20, %s23
    %p29 = scmp.eq.s32.totalorder %s10, 0
    %p30 = por %p28, %p29
    %p31 = scmp.ne.s32.totalorder %s20, %s23
    %p32 = scmp.eq.s32.totalorder %s15, 1
    %p33 = por %p31, %p32
    %p34 = scmp.ne.s32.totalorder %s23, %s24
    %p35 = scmp.eq.s32.totalorder %s15, 0
    %p36 = por %p34, %p35
    %p37 = scmp.ne.s32.totalorder %s23, %s24
    %p38 = scmp.eq.s32.totalorder %s16, 1
    %p39 = por %p37, %p38
    %p41 = scmp.ne.s32.totalorder %s24, %s40
    %p42 = scmp.eq.s32.totalorder %s16, 0
    %p43 = por %p41, %p42
    %s45 = sadd.s32 %s44, 1
    %p48 = scmp.eq.s32.totalorder %s10, 1
    %p49 = scmp.ne.s32.totalorder %s44, %s46
    %p50 = scmp.eq.s32.totalorder %s10, 0
    %p51 = por %p49, %p50
    %p52 = scmp.ne.s32.totalorder %s44, %s46
    %p53 = scmp.eq.s32.totalorder %s15, 1
    %p54 = por %p52, %p53
    %p55 = scmp.ne.s32.totalorder %s46, %s47
    %p56 = scmp.eq.s32.totalorder %s15, 0
    %p57 = por %p55, %p56
    %p58 = scmp.ne.s32.totalorder %s46, %s47
    %p59 = scmp.eq.s32.totalorder %s16, 1
    %p60 = por %p58, %p59
    %p62 = scmp.ne.s32.totalorder %s47, %s61
    %p63 = scmp.eq.s32.totalorder %s16, 0
    %p64 = por %p62, %p63
    %s66 = sadd.s32 %s65, 1
    %p69 = scmp.eq.s32.totalorder %s10, 1
    %p70 = scmp.ne.s32.totalorder %s65, %s67
    %p71 = scmp.eq.s32.totalorder %s10, 0
    %p72 = por %p70, %p71
    %p73 = scmp.ne.s32.totalorder %s65, %s67
    %p74 = scmp.eq.s32.totalorder %s15, 1
    %p75 = por %p73, %p74
    %p76 = scmp.ne.s32.totalorder %s67, %s68
    %p77 = scmp.eq.s32.totalorder %s15, 0
    %p78 = por %p76, %p77
    %p79 = scmp.ne.s32.totalorder %s67, %s68
    %p80 = scmp.eq.s32.totalorder %s16, 1
    %p81 = por %p79, %p80
    %p83 = scmp.ne.s32.totalorder %s68, %s82
    %p84 = scmp.eq.s32.totalorder %s16, 0
    %p85 = por %p83, %p84
    %s87 = sadd.s32 %s86, 1
    %p90 = scmp.eq.s32.totalorder %s10, 1
    %p91 = scmp.ne.s32.totalorder %s86, %s88
    %p92 = scmp.eq.s32.totalorder %s10, 0
    %p93 = por %p91, %p92
    %p94 = scmp.ne.s32.totalorder %s86, %s88
    %p95 = scmp.eq.s32.totalorder %s15, 1
    %p96 = por %p94, %p95
    %p97 = scmp.ne.s32.totalorder %s88, %s89
    %p98 = scmp.eq.s32.totalorder %s15, 0
    %p99 = por %p97, %p98
    %p100 = scmp.ne.s32.totalorder %s88, %s89
    %p101 = scmp.eq.s32.totalorder %s16, 1
    %p102 = por %p100, %p101
    %p104 = scmp.ne.s32.totalorder %s89, %s103
    %p105 = scmp.eq.s32.totalorder %s16, 0
    %p106 = por %p104, %p105
    %s107 = ssub.s32 %s10, %s17
    %p108 = scmp.eq.s32.totalorder %s107, 0
    %s110 = sadd.s32 %s109, 1
    %s111 = scalar_select %p108, %s109, %s110
    %p114 = pneg %p108
    %p115 = scmp.eq.s32.totalorder %s10, 1
    %p116 = por %p114, %p115
    %p117 = scmp.ne.s32.totalorder %s109, %s112
    %p118 = scmp.eq.s32.totalorder %s10, 0
    %p119 = por %p117, %p118
    %p120 = scmp.ne.s32.totalorder %s109, %s112
    %p121 = scmp.eq.s32.totalorder %s15, 1
    %p122 = por %p120, %p121
    %p123 = scmp.ne.s32.totalorder %s112, %s113
    %p124 = scmp.eq.s32.totalorder %s15, 0
    %p125 = por %p123, %p124
    %p126 = scmp.ne.s32.totalorder %s112, %s113
    %p127 = scmp.eq.s32.totalorder %s16, 1
    %p128 = por %p126, %p127
    %p130 = scmp.ne.s32.totalorder %s113, %s129
    %p131 = scmp.eq.s32.totalorder %s16, 0
    %p132 = por %p130, %p131
    %p133 = scmp.le.s32.totalorder 1, %s10
    %p134 = scmp.lt.s32.totalorder %s10, 3
    %p135 = pnand %p133, %p134
    %p136 = pneg %p135
    // Predicated region
    $region9: #{aspp_forward.1} parent=5 // pred_check
      _
    $region10: #{aspp_forward.1} parent=5 // pred_check_branch
      %138 = sbr.rel (%p135) target = $region12
    $region11: #{aspp_forward.1} parent=5 // pred_region
      %s139 = ssub.s32 %s10, 1
      // Predicated region
      $region13: #{aspp_forward.1} parent=11 // pred_check
        %p140 = pneg %p57
      $region14: #{aspp_forward.1} parent=11 // pred_check_branch
        %142 = sbr.rel (%p140) target = $region16
      $region15: #{aspp_forward.1} parent=11 // pred_region
        _
      $region16: #{aspp_forward.1} parent=11 // pred_fallthru
        _
      // Predicated region
      $region17: #{aspp_forward.1} parent=11 // pred_check
        %p143 = pneg %p78
      $region18: #{aspp_forward.1} parent=11 // pred_check_branch
        %145 = sbr.rel (%p143) target = $region20
      $region19: #{aspp_forward.1} parent=11 // pred_region
        _
      $region20: #{aspp_forward.1} parent=11 // pred_fallthru
        _
      // Predicated region
      $region21: #{aspp_forward.1} parent=11 // pred_check
        %p146 = pneg %p99
      $region22: #{aspp_forward.1} parent=11 // pred_check_branch
        %148 = sbr.rel (%p146) target = $region24
      $region23: #{aspp_forward.1} parent=11 // pred_region
        _
      $region24: #{aspp_forward.1} parent=11 // pred_fallthru
        _
    $region12: #{aspp_forward.1} parent=5 // pred_fallthru
      _
    %p149 = scmp.lt.s32.totalorder %s10, 2
    // Predicated region
    $region25: #{aspp_forward.1} parent=5 // pred_check
      %p150 = pneg %p149
    $region26: #{aspp_forward.1} parent=5 // pred_check_branch
      %152 = sbr.rel (%p150) target = $region28
    $region27: #{aspp_forward.1} parent=5 // pred_region
      // Predicated region
      $region29: #{aspp_forward.1} parent=27 // pred_check
        %p153 = pneg %p30
      $region30: #{aspp_forward.1} parent=27 // pred_check_branch
        %155 = sbr.rel (%p153) target = $region32
      $region31: #{aspp_forward.1} parent=27 // pred_region
        %p156 = scmp.lt.s32.totalorder %s10, 1
        %s157 = scalar_select %p156, %s10, 1
        %s158 = smul.addr %s157, 4
        %s159 = smul.addr %s158, 2
        %s160 = scalar_lea.vmem %s0, %s159
      $region32: #{aspp_forward.1} parent=27 // pred_fallthru
        _
    $region28: #{aspp_forward.1} parent=5 // pred_fallthru
      _
    %p161 = scmp.le.s32.totalorder 1, %s10
    %p162 = scmp.lt.s32.totalorder %s10, 3
    %p163 = pnand %p161, %p162
    %p164 = pneg %p163
    // Predicated region
    $region33: #{aspp_forward.1} parent=5 // pred_check
      _
    $region34: #{aspp_forward.1} parent=5 // pred_check_branch
      %166 = sbr.rel (%p163) target = $region36
    $region35: #{aspp_forward.1} parent=5 // pred_region
      %s167 = ssub.s32 %s10, 1
      %p168 = scmp.lt.s32.totalorder %s15, 1
      %s169 = scalar_select %p168, %s15, 1
      %s170 = smul.addr %s169, 4
      %s171 = smul.addr %s170, 2
      %s172 = scalar_lea.vmem %s0, %s171
      %p173 = pneg %p36
      %p174 = pneg %p33
      %p175 = pneg %p57
      %p176 = pneg %p54
      %p177 = pneg %p78
      %p178 = pneg %p75
      %p179 = pneg %p99
      %p180 = pneg %p96
      %p181 = pneg %p125
      %p182 = pneg %p122
      %p183 = scmp.lt.s32.totalorder %s15, 1
      %s184 = scalar_select %p183, %s15, 1
      %s185 = smul.addr %s184, 3
      %s186 = smul.addr %s185, 8
      %s187 = scalar_lea.vmem %s4, %s186
      %p188 = scmp.lt.s32.totalorder %s15, 1
      %s189 = scalar_select %p188, %s15, 1
      %s190 = smul.addr %s189, 4
      %s191 = smul.addr %s190, 2
      %s192 = scalar_lea.vmem %s0, %s191
      %p193 = scmp.lt.s32.totalorder %s15, 1
      %s194 = scalar_select %p193, %s15, 1
      %s195 = smul.addr %s194, 3
      %s196 = smul.addr %s195, 8
      %s197 = scalar_lea.vmem %s4, %s196
      %v199 = vld [vmem:[%s2] sm:$0xff]
      %v200 = vld [vmem:[%s3] sm:$0xff]
      %v201 = vld [vmem:[%s192] sm:$0x3f]
      %v202 = vld [vmem:[%s1] sm:$0xf]
      %v203 = vld [vmem:[%s192] sm:$0xff]
      %s204 = scalar_lea.vmem %s1, 4
      %v205 = vld [vmem:[%s204] sm:$0xf]
      %v207 = vcombine.high %v203, %v203
      %v209 = vunpack.c.l.s4 1983009808
      %v210 = vunpack.c.0.s8 %v209
      %v211 = vlaneseq
      %v212 = vshrl.u32 %v211, 7
      %v213 = vsub.s32 %v210, %v212
      %v214 = vrot.slane %v203, %v213
      %v216 = vunpack.c.l.s4 1983009808
      %v217 = vunpack.c.0.s8 %v216
      %v218 = vlaneseq
      %v219 = vshrl.u32 %v218, 7
      %v220 = vsub.s32 %v217, %v219
      %v221 = vrot.slane %v207, %v220
      %v222 = vcombine.high %v214, %v214
      %v223 = vcombine.high %v221, %v221
      %224 = vrot.lane.b32.xlu0 %v214, 126
      %v225 = vpop.permute.xlu0 %224
      %226 = vrot.lane.b32.xlu0 %v222, 126
      %v227 = vpop.permute.xlu0 %226
      %228 = vrot.lane.b32.xlu0 %v221, 126
      %v229 = vpop.permute.xlu0 %228
      %230 = vrot.lane.b32.xlu0 %v223, 126
      %v231 = vpop.permute.xlu0 %230
      %vm232 = vcmask 1031168
      %v233 = vsel %vm232, %v225, %v227
      %v234 = vsel %vm232, %v227, %v229
      %v235 = vsel %vm232, %v229, %v231
      %vm236 = vcmask 31744
      %v238 = vsel %vm236, %v205, 0
      %vm240 = vcmask 1041408
      %v242 = vsel %vm240, %v233, 0
      %v245 = vsel %vm240, %v234, 0
      %v248 = vsel %vm240, %v235, 0
      %250 = vmatprep.subr.bf16.mxu0 %v245
      %251 = vmatpush1.bf16.msra.mxu0 %v242
      %252 = vmatprep.subr.bf16.mxu0 0
      %253 = vmatpush1.bf16.msra.mxu0 0
      %254 = vmatprep.subr.bf16.mxu0 0
      %255 = vmatpush1.bf16.msra.mxu0 0
      %256 = vmatprep.subr.bf16.mxu0 0
      %257 = vmatpush1.bf16.msra.mxu0 0
      %258 = vmatprep.subr.bf16.mxu0 0
      %259 = vmatpush1.bf16.msra.mxu0 0
      %260 = vmatprep.subr.bf16.mxu0 0
      %261 = vmatpush1.bf16.msra.mxu0 0
      %262 = vmatprep.subr.bf16.mxu0 0
      %263 = vmatpush1.bf16.msra.mxu0 0
      %264 = vmatprep.subr.bf16.mxu0 0
      %265 = vmatpush1.bf16.msra.mxu0 0
      %266 = vmatprep.subr.bf16.mxu0 0
      %267 = vmatpush1.bf16.msra.mxu0 0
      %268 = vmatprep.subr.bf16.mxu0 0
      %269 = vmatpush1.bf16.msra.mxu0 0
      %270 = vmatprep.subr.bf16.mxu0 0
      %271 = vmatpush1.bf16.msra.mxu0 0
      %272 = vmatprep.subr.bf16.mxu0 0
      %273 = vmatpush1.bf16.msra.mxu0 0
      %274 = vmatprep.subr.bf16.mxu0 0
      %275 = vmatpush1.bf16.msra.mxu0 0
      %276 = vmatprep.subr.bf16.mxu0 0
      %277 = vmatpush1.bf16.msra.mxu0 0
      %278 = vmatprep.subr.bf16.mxu0 0
      %279 = vmatpush1.bf16.msra.mxu0 0
      %280 = vmatprep.subr.bf16.mxu0 0
      %281 = vmatpush1.bf16.msra.mxu0 0
      %282 = vmatprep.mubr.bf16.mxu0 0
      %283 = vmatmul.mubr.bf16.gmra.mrb[0].mxu0 %v238
      %v284 = vpop.f32.mrb[0].mxu0
      %v285 = vadd.f32 0.0, %v284
      %v286 = vpop.f32.mrb[0].mxu0
      %v287 = vadd.f32 0.0, %v286
      %v288 = vpop.f32.mrb[0].mxu0
      %v289 = vpop.f32.mrb[0].mxu0
      %290 = vdwg.mxu0
      %291 = vmatprep.subr.bf16.mxu0 0
      %292 = vmatpush1.bf16.msra.mxu0 %v248
      %293 = vmatprep.subr.bf16.mxu0 0
      %294 = vmatpush1.bf16.msra.mxu0 0
      %295 = vmatprep.subr.bf16.mxu0 0
      %296 = vmatpush1.bf16.msra.mxu0 0
      %297 = vmatprep.subr.bf16.mxu0 0
      %298 = vmatpush1.bf16.msra.mxu0 0
      %299 = vmatprep.subr.bf16.mxu0 0
      %300 = vmatpush1.bf16.msra.mxu0 0
      %301 = vmatprep.subr.bf16.mxu0 0
      %302 = vmatpush1.bf16.msra.mxu0 0
      %303 = vmatprep.subr.bf16.mxu0 0
      %304 = vmatpush1.bf16.msra.mxu0 0
      %305 = vmatprep.subr.bf16.mxu0 0
      %306 = vmatpush1.bf16.msra.mxu0 0
      %307 = vmatprep.subr.bf16.mxu0 0
      %308 = vmatpush1.bf16.msra.mxu0 0
      %309 = vmatprep.subr.bf16.mxu0 0
      %310 = vmatpush1.bf16.msra.mxu0 0
      %311 = vmatprep.subr.bf16.mxu0 0
      %312 = vmatpush1.bf16.msra.mxu0 0
      %313 = vmatprep.subr.bf16.mxu0 0
      %314 = vmatpush1.bf16.msra.mxu0 0
      %315 = vmatprep.subr.bf16.mxu0 0
      %316 = vmatpush1.bf16.msra.mxu0 0
      %317 = vmatprep.subr.bf16.mxu0 0
      %318 = vmatpush1.bf16.msra.mxu0 0
      %319 = vmatprep.subr.bf16.mxu0 0
      %320 = vmatpush1.bf16.msra.mxu0 0
      %321 = vmatprep.subr.bf16.mxu0 0
      %322 = vmatpush1.bf16.msra.mxu0 0
      %323 = vmatprep.mubr.bf16.mxu0 0
      %324 = vmatmul.mubr.bf16.gmra.mrb[0].mxu0 %v238
      %v325 = vpop.f32.mrb[0].mxu0
      %v326 = vadd.f32 0.0, %v325
      %v327 = vpop.f32.mrb[0].mxu0
      %v328 = vpop.f32.mrb[0].mxu0
      %v329 = vpop.f32.mrb[0].mxu0
      %330 = vdwg.mxu0
      %v332 = vcombine.high %v201, %v201
      %v334 = vunpack.c.l.s4 1983009808
      %v335 = vunpack.c.0.s8 %v334
      %v336 = vlaneseq
      %v337 = vshrl.u32 %v336, 7
      %v338 = vsub.s32 %v335, %v337
      %v339 = vrot.slane %v201, %v338
      %v341 = vunpack.c.l.s4 1983009808
      %v342 = vunpack.c.0.s8 %v341
      %v343 = vlaneseq
      %v344 = vshrl.u32 %v343, 7
      %v345 = vsub.s32 %v342, %v344
      %v346 = vrot.slane %v332, %v345
      %v347 = vcombine.high %v339, %v339
      %v349 = vsel %vm236, %v202, 0
      %v352 = vsel %vm240, %v339, 0
      %v355 = vsel %vm240, %v347, 0
      %v358 = vsel %vm240, %v346, 0
      %360 = vmatprep.subr.bf16.mxu0 %v355
      %361 = vmatpush1.bf16.msra.mxu0 %v352
      %362 = vmatprep.subr.bf16.mxu0 0
      %363 = vmatpush1.bf16.msra.mxu0 0
      %364 = vmatprep.subr.bf16.mxu0 0
      %365 = vmatpush1.bf16.msra.mxu0 0
      %366 = vmatprep.subr.bf16.mxu0 0
      %367 = vmatpush1.bf16.msra.mxu0 0
      %368 = vmatprep.subr.bf16.mxu0 0
      %369 = vmatpush1.bf16.msra.mxu0 0
      %370 = vmatprep.subr.bf16.mxu0 0
      %371 = vmatpush1.bf16.msra.mxu0 0
      %372 = vmatprep.subr.bf16.mxu0 0
      %373 = vmatpush1.bf16.msra.mxu0 0
      %374 = vmatprep.subr.bf16.mxu0 0
      %375 = vmatpush1.bf16.msra.mxu0 0
      %376 = vmatprep.subr.bf16.mxu0 0
      %377 = vmatpush1.bf16.msra.mxu0 0
      %378 = vmatprep.subr.bf16.mxu0 0
      %379 = vmatpush1.bf16.msra.mxu0 0
      %380 = vmatprep.subr.bf16.mxu0 0
      %381 = vmatpush1.bf16.msra.mxu0 0
      %382 = vmatprep.subr.bf16.mxu0 0
      %383 = vmatpush1.bf16.msra.mxu0 0
      %384 = vmatprep.subr.bf16.mxu0 0
      %385 = vmatpush1.bf16.msra.mxu0 0
      %386 = vmatprep.subr.bf16.mxu0 0
      %387 = vmatpush1.bf16.msra.mxu0 0
      %388 = vmatprep.subr.bf16.mxu0 0
      %389 = vmatpush1.bf16.msra.mxu0 0
      %390 = vmatprep.subr.bf16.mxu0 0
      %391 = vmatpush1.bf16.msra.mxu0 0
      %392 = vmatprep.mubr.bf16.mxu0 0
      %393 = vmatmul.mubr.bf16.gmra.mrb[0].mxu0 %v349
      %v394 = vpop.f32.mrb[0].mxu0
      %v395 = vadd.f32 %v285, %v394
      %v396 = vpop.f32.mrb[0].mxu0
      %v397 = vadd.f32 %v287, %v396
      %v398 = vpop.f32.mrb[0].mxu0
      %v399 = vpop.f32.mrb[0].mxu0
      %400 = vdwg.mxu0
      %401 = vmatprep.subr.bf16.mxu0 0
      %402 = vmatpush1.bf16.msra.mxu0 %v358
      %403 = vmatprep.subr.bf16.mxu0 0
      %404 = vmatpush1.bf16.msra.mxu0 0
      %405 = vmatprep.subr.bf16.mxu0 0
      %406 = vmatpush1.bf16.msra.mxu0 0
      %407 = vmatprep.subr.bf16.mxu0 0
      %408 = vmatpush1.bf16.msra.mxu0 0
      %409 = vmatprep.subr.bf16.mxu0 0
      %410 = vmatpush1.bf16.msra.mxu0 0
      %411 = vmatprep.subr.bf16.mxu0 0
      %412 = vmatpush1.bf16.msra.mxu0 0
      %413 = vmatprep.subr.bf16.mxu0 0
      %414 = vmatpush1.bf16.msra.mxu0 0
      %415 = vmatprep.subr.bf16.mxu0 0
      %416 = vmatpush1.bf16.msra.mxu0 0
      %417 = vmatprep.subr.bf16.mxu0 0
      %418 = vmatpush1.bf16.msra.mxu0 0
      %419 = vmatprep.subr.bf16.mxu0 0
      %420 = vmatpush1.bf16.msra.mxu0 0
      %421 = vmatprep.subr.bf16.mxu0 0
      %422 = vmatpush1.bf16.msra.mxu0 0
      %423 = vmatprep.subr.bf16.mxu0 0
      %424 = vmatpush1.bf16.msra.mxu0 0
      %425 = vmatprep.subr.bf16.mxu0 0
      %426 = vmatpush1.bf16.msra.mxu0 0
      %427 = vmatprep.subr.bf16.mxu0 0
      %428 = vmatpush1.bf16.msra.mxu0 0
      %429 = vmatprep.subr.bf16.mxu0 0
      %430 = vmatpush1.bf16.msra.mxu0 0
      %431 = vmatprep.subr.bf16.mxu0 0
      %432 = vmatpush1.bf16.msra.mxu0 0
      %433 = vmatprep.mubr.bf16.mxu0 0
      %434 = vmatmul.mubr.bf16.gmra.mrb[0].mxu0 %v349
      %v435 = vpop.f32.mrb[0].mxu0
      %v436 = vadd.f32 %v326, %v435
      %v437 = vpop.f32.mrb[0].mxu0
      %v438 = vpop.f32.mrb[0].mxu0
      %v439 = vpop.f32.mrb[0].mxu0
      %440 = vdwg.mxu0
      %v441 = vld [vmem:[%s192] sm:$0xff]
      %s442 = scalar_lea.vmem %s1, 8
      %v443 = vld [vmem:[%s442] sm:$0xf]
      %v445 = vcombine.high %v441, %v441
      %v447 = vunpack.c.l.s4 1983009808
      %v448 = vunpack.c.0.s8 %v447
      %v449 = vlaneseq
      %v450 = vshrl.u32 %v449, 7
      %v451 = vsub.s32 %v448, %v450
      %v452 = vrot.slane %v441, %v451
      %v454 = vunpack.c.l.s4 1983009808
      %v455 = vunpack.c.0.s8 %v454
      %v456 = vlaneseq
      %v457 = vshrl.u32 %v456, 7
      %v458 = vsub.s32 %v455, %v457
      %v459 = vrot.slane %v445, %v458
      %v460 = vcombine.high %v452, %v452
      %v461 = vcombine.high %v459, %v459
      %462 = vrot.lane.b32.xlu0 %v452, 124
      %v463 = vpop.permute.xlu0 %462
      %464 = vrot.lane.b32.xlu0 %v460, 124
      %v465 = vpop.permute.xlu0 %464
      %466 = vrot.lane.b32.xlu0 %v459, 124
      %v467 = vpop.permute.xlu0 %466
      %468 = vrot.lane.b32.xlu0 %v461, 124
      %v469 = vpop.permute.xlu0 %468
      %vm470 = vcmask 1014784
      %v471 = vsel %vm470, %v463, %v465
      %v472 = vsel %vm470, %v465, %v467
      %v473 = vsel %vm470, %v467, %v469
      %v475 = vsel %vm236, %v443, 0
      %v478 = vsel %vm240, %v471, 0
      %v481 = vsel %vm240, %v472, 0
      %v484 = vsel %vm240, %v473, 0
      %486 = vmatprep.subr.bf16.mxu0 %v481
      %487 = vmatpush1.bf16.msra.mxu0 %v478
      %488 = vmatprep.subr.bf16.mxu0 0
      %489 = vmatpush1.bf16.msra.mxu0 0
      %490 = vmatprep.subr.bf16.mxu0 0
      %491 = vmatpush1.bf16.msra.mxu0 0
      %492 = vmatprep.subr.bf16.mxu0 0
      %493 = vmatpush1.bf16.msra.mxu0 0
      %494 = vmatprep.subr.bf16.mxu0 0
      %495 = vmatpush1.bf16.msra.mxu0 0
      %496 = vmatprep.subr.bf16.mxu0 0
      %497 = vmatpush1.bf16.msra.mxu0 0
      %498 = vmatprep.subr.bf16.mxu0 0
      %499 = vmatpush1.bf16.msra.mxu0 0
      %500 = vmatprep.subr.bf16.mxu0 0
      %501 = vmatpush1.bf16.msra.mxu0 0
      %502 = vmatprep.subr.bf16.mxu0 0
      %503 = vmatpush1.bf16.msra.mxu0 0
      %504 = vmatprep.subr.bf16.mxu0 0
      %505 = vmatpush1.bf16.msra.mxu0 0
      %506 = vmatprep.subr.bf16.mxu0 0
      %507 = vmatpush1.bf16.msra.mxu0 0
      %508 = vmatprep.subr.bf16.mxu0 0
      %509 = vmatpush1.bf16.msra.mxu0 0
      %510 = vmatprep.subr.bf16.mxu0 0
      %511 = vmatpush1.bf16.msra.mxu0 0
      %512 = vmatprep.subr.bf16.mxu0 0
      %513 = vmatpush1.bf16.msra.mxu0 0
      %514 = vmatprep.subr.bf16.mxu0 0
      %515 = vmatpush1.bf16.msra.mxu0 0
      %516 = vmatprep.subr.bf16.mxu0 0
      %517 = vmatpush1.bf16.msra.mxu0 0
      %518 = vmatprep.mubr.bf16.mxu0 0
      %519 = vmatmul.mubr.bf16.gmra.mrb[0].mxu0 %v475
      %v520 = vpop.f32.mrb[0].mxu0
      %v521 = vadd.f32 0.0, %v520
      %v522 = vpop.f32.mrb[0].mxu0
      %v523 = vadd.f32 0.0, %v522
      %v524 = vpop.f32.mrb[0].mxu0
      %v525 = vpop.f32.mrb[0].mxu0
      %526 = vdwg.mxu0
      %527 = vmatprep.subr.bf16.mxu0 0
      %528 = vmatpush1.bf16.msra.mxu0 %v484
      %529 = vmatprep.subr.bf16.mxu0 0
      %530 = vmatpush1.bf16.msra.mxu0 0
      %531 = vmatprep.subr.bf16.mxu0 0
      %532 = vmatpush1.bf16.msra.mxu0 0
      %533 = vmatprep.subr.bf16.mxu0 0
      %534 = vmatpush1.bf16.msra.mxu0 0
      %535 = vmatprep.subr.bf16.mxu0 0
      %536 = vmatpush1.bf16.msra.mxu0 0
      %537 = vmatprep.subr.bf16.mxu0 0
      %538 = vmatpush1.bf16.msra.mxu0 0
      %539 = vmatprep.subr.bf16.mxu0 0
      %540 = vmatpush1.bf16.msra.mxu0 0
      %541 = vmatprep.subr.bf16.mxu0 0
      %542 = vmatpush1.bf16.msra.mxu0 0
      %543 = vmatprep.subr.bf16.mxu0 0
      %544 = vmatpush1.bf16.msra.mxu0 0
      %545 = vmatprep.subr.bf16.mxu0 0
      %546 = vmatpush1.bf16.msra.mxu0 0
      %547 = vmatprep.subr.bf16.mxu0 0
      %548 = vmatpush1.bf16.msra.mxu0 0
      %549 = vmatprep.subr.bf16.mxu0 0
      %550 = vmatpush1.bf16.msra.mxu0 0
      %551 = vmatprep.subr.bf16.mxu0 0
      %552 = vmatpush1.bf16.msra.mxu0 0
      %553 = vmatprep.subr.bf16.mxu0 0
      %554 = vmatpush1.bf16.msra.mxu0 0
      %555 = vmatprep.subr.bf16.mxu0 0
      %556 = vmatpush1.bf16.msra.mxu0 0
      %557 = vmatprep.subr.bf16.mxu0 0
      %558 = vmatpush1.bf16.msra.mxu0 0
      %559 = vmatprep.mubr.bf16.mxu0 0
      %560 = vmatmul.mubr.bf16.gmra.mrb[0].mxu0 %v475
      %v561 = vpop.f32.mrb[0].mxu0
      %v562 = vadd.f32 0.0, %v561
      %v563 = vpop.f32.mrb[0].mxu0
      %v564 = vpop.f32.mrb[0].mxu0
      %v565 = vpop.f32.mrb[0].mxu0
      %566 = vdwg.mxu0
      %v567 = vadd.f32 %v395, %v521
      %v568 = vadd.f32 %v397, %v523
      %v569 = vadd.f32 %v436, %v562
      %v570 = vld [vmem:[%s192] sm:$0xff]
      %s571 = scalar_lea.vmem %s1, 12
      %v572 = vld [vmem:[%s571] sm:$0xf]
      %v574 = vcombine.high %v570, %v570
      %v576 = vunpack.c.l.s4 1983009808
      %v577 = vunpack.c.0.s8 %v576
      %v578 = vlaneseq
      %v579 = vshrl.u32 %v578, 7
      %v580 = vsub.s32 %v577, %v579
      %v581 = vrot.slane %v570, %v580
      %v583 = vunpack.c.l.s4 1983009808
      %v584 = vunpack.c.0.s8 %v583
      %v585 = vlaneseq
      %v586 = vshrl.u32 %v585, 7
      %v587 = vsub.s32 %v584, %v586
      %v588 = vrot.slane %v574, %v587
      %v589 = vcombine.high %v581, %v581
      %v590 = vcombine.high %v588, %v588
      %591 = vrot.lane.b32.xlu0 %v581, 88
      %v592 = vpop.permute.xlu0 %591
      %593 = vrot.lane.b32.xlu0 %v589, 88
      %v594 = vpop.permute.xlu0 %593
      %595 = vrot.lane.b32.xlu0 %v588, 88
      %v596 = vpop.permute.xlu0 %595
      %597 = vrot.lane.b32.xlu0 %v590, 88
      %v598 = vpop.permute.xlu0 %597
      %vm599 = vcmask 719872
      %v600 = vsel %vm599, %v592, %v594
      %v601 = vsel %vm599, %v594, %v596
      %v602 = vsel %vm599, %v596, %v598
      %v604 = vsel %vm236, %v572, 0
      %v607 = vsel %vm240, %v600, 0
      %v610 = vsel %vm240, %v601, 0
      %v613 = vsel %vm240, %v602, 0
      %615 = vmatprep.subr.bf16.mxu0 %v610
      %616 = vmatpush1.bf16.msra.mxu0 %v607
      %617 = vmatprep.subr.bf16.mxu0 0
      %618 = vmatpush1.bf16.msra.mxu0 0
      %619 = vmatprep.subr.bf16.mxu0 0
      %620 = vmatpush1.bf16.msra.mxu0 0
      %621 = vmatprep.subr.bf16.mxu0 0
      %622 = vmatpush1.bf16.msra.mxu0 0
      %623 = vmatprep.subr.bf16.mxu0 0
      %624 = vmatpush1.bf16.msra.mxu0 0
      %625 = vmatprep.subr.bf16.mxu0 0
      %626 = vmatpush1.bf16.msra.mxu0 0
      %627 = vmatprep.subr.bf16.mxu0 0
      %628 = vmatpush1.bf16.msra.mxu0 0
      %629 = vmatprep.subr.bf16.mxu0 0
      %630 = vmatpush1.bf16.msra.mxu0 0
      %631 = vmatprep.subr.bf16.mxu0 0
      %632 = vmatpush1.bf16.msra.mxu0 0
      %633 = vmatprep.subr.bf16.mxu0 0
      %634 = vmatpush1.bf16.msra.mxu0 0
      %635 = vmatprep.subr.bf16.mxu0 0
      %636 = vmatpush1.bf16.msra.mxu0 0
      %637 = vmatprep.subr.bf16.mxu0 0
      %638 = vmatpush1.bf16.msra.mxu0 0
      %639 = vmatprep.subr.bf16.mxu0 0
      %640 = vmatpush1.bf16.msra.mxu0 0
      %641 = vmatprep.subr.bf16.mxu0 0
      %642 = vmatpush1.bf16.msra.mxu0 0
      %643 = vmatprep.subr.bf16.mxu0 0
      %644 = vmatpush1.bf16.msra.mxu0 0
      %645 = vmatprep.subr.bf16.mxu0 0
      %646 = vmatpush1.bf16.msra.mxu0 0
      %647 = vmatprep.mubr.bf16.mxu0 0
      %648 = vmatmul.mubr.bf16.gmra.mrb[0].mxu0 %v604
      %v649 = vpop.f32.mrb[0].mxu0
      %v650 = vadd.f32 0.0, %v649
      %v651 = vpop.f32.mrb[0].mxu0
      %v652 = vadd.f32 0.0, %v651
      %v653 = vpop.f32.mrb[0].mxu0
      %v654 = vpop.f32.mrb[0].mxu0
      %655 = vdwg.mxu0
      %656 = vmatprep.subr.bf16.mxu0 0
      %657 = vmatpush1.bf16.msra.mxu0 %v613
      %658 = vmatprep.subr.bf16.mxu0 0
      %659 = vmatpush1.bf16.msra.mxu0 0
      %660 = vmatprep.subr.bf16.mxu0 0
      %661 = vmatpush1.bf16.msra.mxu0 0
      %662 = vmatprep.subr.bf16.mxu0 0
      %663 = vmatpush1.bf16.msra.mxu0 0
      %664 = vmatprep.subr.bf16.mxu0 0
      %665 = vmatpush1.bf16.msra.mxu0 0
      %666 = vmatprep.subr.bf16.mxu0 0
      %667 = vmatpush1.bf16.msra.mxu0 0
      %668 = vmatprep.subr.bf16.mxu0 0
      %669 = vmatpush1.bf16.msra.mxu0 0
      %670 = vmatprep.subr.bf16.mxu0 0
      %671 = vmatpush1.bf16.msra.mxu0 0
      %672 = vmatprep.subr.bf16.mxu0 0
      %673 = vmatpush1.bf16.msra.mxu0 0
      %674 = vmatprep.subr.bf16.mxu0 0
      %675 = vmatpush1.bf16.msra.mxu0 0
      %676 = vmatprep.subr.bf16.mxu0 0
      %677 = vmatpush1.bf16.msra.mxu0 0
      %678 = vmatprep.subr.bf16.mxu0 0
      %679 = vmatpush1.bf16.msra.mxu0 0
      %680 = vmatprep.subr.bf16.mxu0 0
      %681 = vmatpush1.bf16.msra.mxu0 0
      %682 = vmatprep.subr.bf16.mxu0 0
      %683 = vmatpush1.bf16.msra.mxu0 0
      %684 = vmatprep.subr.bf16.mxu0 0
      %685 = vmatpush1.bf16.msra.mxu0 0
      %686 = vmatprep.subr.bf16.mxu0 0
      %687 = vmatpush1.bf16.msra.mxu0 0
      %688 = vmatprep.mubr.bf16.mxu0 0
      %689 = vmatmul.mubr.bf16.gmra.mrb[0].mxu0 %v604
      %v690 = vpop.f32.mrb[0].mxu0
      %v691 = vadd.f32 0.0, %v690
      %v692 = vpop.f32.mrb[0].mxu0
      %v693 = vpop.f32.mrb[0].mxu0
      %v694 = vpop.f32.mrb[0].mxu0
      %695 = vdwg.mxu0
      %v696 = vadd.f32 %v567, %v650
      %v697 = vadd.f32 %v568, %v652
      %v698 = vadd.f32 %v569, %v691
      %v699 = vld [vmem:[%s192] sm:$0xff]
      %s700 = scalar_lea.vmem %s1, 16
      %v701 = vld [vmem:[%s700] sm:$0xf]
      %v703 = vcombine.high %v699, %v699
      %v705 = vunpack.c.l.s4 1983009808
      %v706 = vunpack.c.0.s8 %v705
      %v707 = vlaneseq
      %v708 = vshrl.u32 %v707, 7
      %v709 = vsub.s32 %v706, %v708
      %v710 = vrot.slane %v699, %v709
      %v712 = vunpack.c.l.s4 1983009808
      %v713 = vunpack.c.0.s8 %v712
      %v714 = vlaneseq
      %v715 = vshrl.u32 %v714, 7
      %v716 = vsub.s32 %v713, %v715
      %v717 = vrot.slane %v703, %v716
      %v718 = vcombine.high %v710, %v710
      %v719 = vcombine.high %v717, %v717
      %720 = vrot.lane.b32.xlu0 %v710, 86
      %v721 = vpop.permute.xlu0 %720
      %722 = vrot.lane.b32.xlu0 %v718, 86
      %v723 = vpop.permute.xlu0 %722
      %724 = vrot.lane.b32.xlu0 %v717, 86
      %v725 = vpop.permute.xlu0 %724
      %726 = vrot.lane.b32.xlu0 %v719, 86
      %v727 = vpop.permute.xlu0 %726
      %vm728 = vcmask 703488
      %v729 = vsel %vm728, %v721, %v723
      %v730 = vsel %vm728, %v723, %v725
      %v731 = vsel %vm728, %v725, %v727
      %v733 = vsel %vm236, %v701, 0
      %v736 = vsel %vm240, %v729, 0
      %v739 = vsel %vm240, %v730, 0
      %v742 = vsel %vm240, %v731, 0
      %744 = vmatprep.subr.bf16.mxu0 %v739
      %745 = vmatpush1.bf16.msra.mxu0 %v736
      %746 = vmatprep.subr.bf16.mxu0 0
      %747 = vmatpush1.bf16.msra.mxu0 0
      %748 = vmatprep.subr.bf16.mxu0 0
      %749 = vmatpush1.bf16.msra.mxu0 0
      %750 = vmatprep.subr.bf16.mxu0 0
      %751 = vmatpush1.bf16.msra.mxu0 0
      %752 = vmatprep.subr.bf16.mxu0 0
      %753 = vmatpush1.bf16.msra.mxu0 0
      %754 = vmatprep.subr.bf16.mxu0 0
      %755 = vmatpush1.bf16.msra.mxu0 0
      %756 = vmatprep.subr.bf16.mxu0 0
      %757 = vmatpush1.bf16.msra.mxu0 0
      %758 = vmatprep.subr.bf16.mxu0 0
      %759 = vmatpush1.bf16.msra.mxu0 0
      %760 = vmatprep.subr.bf16.mxu0 0
      %761 = vmatpush1.bf16.msra.mxu0 0
      %762 = vmatprep.subr.bf16.mxu0 0
      %763 = vmatpush1.bf16.msra.mxu0 0
      %764 = vmatprep.subr.bf16.mxu0 0
      %765 = vmatpush1.bf16.msra.mxu0 0
      %766 = vmatprep.subr.bf16.mxu0 0
      %767 = vmatpush1.bf16.msra.mxu0 0
      %768 = vmatprep.subr.bf16.mxu0 0
      %769 = vmatpush1.bf16.msra.mxu0 0
      %770 = vmatprep.subr.bf16.mxu0 0
      %771 = vmatpush1.bf16.msra.mxu0 0
      %772 = vmatprep.subr.bf16.mxu0 0
      %773 = vmatpush1.bf16.msra.mxu0 0
      %774 = vmatprep.subr.bf16.mxu0 0
      %775 = vmatpush1.bf16.msra.mxu0 0
      %776 = vmatprep.mubr.bf16.mxu0 0
      %777 = vmatmul.mubr.bf16.gmra.mrb[0].mxu0 %v733
      %v778 = vpop.f32.mrb[0].mxu0
      %v779 = vadd.f32 0.0, %v778
      %v780 = vpop.f32.mrb[0].mxu0
      %v781 = vadd.f32 0.0, %v780
      %v782 = vpop.f32.mrb[0].mxu0
      %v783 = vpop.f32.mrb[0].mxu0
      %784 = vdwg.mxu0
      %785 = vmatprep.subr.bf16.mxu0 0
      %786 = vmatpush1.bf16.msra.mxu0 %v742
      %787 = vmatprep.subr.bf16.mxu0 0
      %788 = vmatpush1.bf16.msra.mxu0 0
      %789 = vmatprep.subr.bf16.mxu0 0
      %790 = vmatpush1.bf16.msra.mxu0 0
      %791 = vmatprep.subr.bf16.mxu0 0
      %792 = vmatpush1.bf16.msra.mxu0 0
      %793 = vmatprep.subr.bf16.mxu0 0
      %794 = vmatpush1.bf16.msra.mxu0 0
      %795 = vmatprep.subr.bf16.mxu0 0
      %796 = vmatpush1.bf16.msra.mxu0 0
      %797 = vmatprep.subr.bf16.mxu0 0
      %798 = vmatpush1.bf16.msra.mxu0 0
      %799 = vmatprep.subr.bf16.mxu0 0
      %800 = vmatpush1.bf16.msra.mxu0 0
      %801 = vmatprep.subr.bf16.mxu0 0
      %802 = vmatpush1.bf16.msra.mxu0 0
      %803 = vmatprep.subr.bf16.mxu0 0
      %804 = vmatpush1.bf16.msra.mxu0 0
      %805 = vmatprep.subr.bf16.mxu0 0
      %806 = vmatpush1.bf16.msra.mxu0 0
      %807 = vmatprep.subr.bf16.mxu0 0
      %808 = vmatpush1.bf16.msra.mxu0 0
      %809 = vmatprep.subr.bf16.mxu0 0
      %810 = vmatpush1.bf16.msra.mxu0 0
      %811 = vmatprep.subr.bf16.mxu0 0
      %812 = vmatpush1.bf16.msra.mxu0 0
      %813 = vmatprep.subr.bf16.mxu0 0
      %814 = vmatpush1.bf16.msra.mxu0 0
      %815 = vmatprep.subr.bf16.mxu0 0
      %816 = vmatpush1.bf16.msra.mxu0 0
      %817 = vmatprep.mubr.bf16.mxu0 0
      %818 = vmatmul.mubr.bf16.gmra.mrb[0].mxu0 %v733
      %v819 = vpop.f32.mrb[0].mxu0
      %v820 = vadd.f32 0.0, %v819
      %v821 = vpop.f32.mrb[0].mxu0
      %v822 = vpop.f32.mrb[0].mxu0
      %v823 = vpop.f32.mrb[0].mxu0
      %824 = vdwg.mxu0
      %v825 = vadd.f32 %v696, %v779
      %v826 = vadd.f32 %v697, %v781
      %v827 = vadd.f32 %v698, %v820
      %v828 = vld [vmem:[%s192] sm:$0xff]
      %s829 = scalar_lea.vmem %s1, 20
      %v830 = vld [vmem:[%s829] sm:$0xf]
      %v832 = vcombine.high %v828, %v828
      %v834 = vunpack.c.l.s4 1983009808
      %v835 = vunpack.c.0.s8 %v834
      %v836 = vlaneseq
      %v837 = vshrl.u32 %v836, 7
      %v838 = vsub.s32 %v835, %v837
      %v839 = vrot.slane %v828, %v838
      %v841 = vunpack.c.l.s4 1983009808
      %v842 = vunpack.c.0.s8 %v841
      %v843 = vlaneseq
      %v844 = vshrl.u32 %v843, 7
      %v845 = vsub.s32 %v842, %v844
      %v846 = vrot.slane %v832, %v845
      %v847 = vcombine.high %v839, %v839
      %v848 = vcombine.high %v846, %v846
      %849 = vrot.lane.b32.xlu0 %v839, 84
      %v850 = vpop.permute.xlu0 %849
      %851 = vrot.lane.b32.xlu0 %v847, 84
      %v852 = vpop.permute.xlu0 %851
      %853 = vrot.lane.b32.xlu0 %v846, 84
      %v854 = vpop.permute.xlu0 %853
      %855 = vrot.lane.b32.xlu0 %v848, 84
      %v856 = vpop.permute.xlu0 %855
      %vm857 = vcmask 687104
      %v858 = vsel %vm857, %v850, %v852
      %v859 = vsel %vm857, %v852, %v854
      %v860 = vsel %vm857, %v854, %v856
      %v862 = vsel %vm236, %v830, 0
      %v865 = vsel %vm240, %v858, 0
      %v868 = vsel %vm240, %v859, 0
      %v871 = vsel %vm240, %v860, 0
      %873 = vmatprep.subr.bf16.mxu0 %v868
      %874 = vmatpush1.bf16.msra.mxu0 %v865
      %875 = vmatprep.subr.bf16.mxu0 0
      %876 = vmatpush1.bf16.msra.mxu0 0
      %877 = vmatprep.subr.bf16.mxu0 0
      %878 = vmatpush1.bf16.msra.mxu0 0
      %879 = vmatprep.subr.bf16.mxu0 0
      %880 = vmatpush1.bf16.msra.mxu0 0
      %881 = vmatprep.subr.bf16.mxu0 0
      %882 = vmatpush1.bf16.msra.mxu0 0
      %883 = vmatprep.subr.bf16.mxu0 0
      %884 = vmatpush1.bf16.msra.mxu0 0
      %885 = vmatprep.subr.bf16.mxu0 0
      %886 = vmatpush1.bf16.msra.mxu0 0
      %887 = vmatprep.subr.bf16.mxu0 0
      %888 = vmatpush1.bf16.msra.mxu0 0
      %889 = vmatprep.subr.bf16.mxu0 0
      %890 = vmatpush1.bf16.msra.mxu0 0
      %891 = vmatprep.subr.bf16.mxu0 0
      %892 = vmatpush1.bf16.msra.mxu0 0
      %893 = vmatprep.subr.bf16.mxu0 0
      %894 = vmatpush1.bf16.msra.mxu0 0
      %895 = vmatprep.subr.bf16.mxu0 0
      %896 = vmatpush1.bf16.msra.mxu0 0
      %897 = vmatprep.subr.bf16.mxu0 0
      %898 = vmatpush1.bf16.msra.mxu0 0
      %899 = vmatprep.subr.bf16.mxu0 0
      %900 = vmatpush1.bf16.msra.mxu0 0
      %901 = vmatprep.subr.bf16.mxu0 0
      %902 = vmatpush1.bf16.msra.mxu0 0
      %903 = vmatprep.subr.bf16.mxu0 0
      %904 = vmatpush1.bf16.msra.mxu0 0
      %905 = vmatprep.mubr.bf16.mxu0 0
      %906 = vmatmul.mubr.bf16.gmra.mrb[0].mxu0 %v862
      %v907 = vpop.f32.mrb[0].mxu0
      %v908 = vadd.f32 0.0, %v907
      %v909 = vpop.f32.mrb[0].mxu0
      %v910 = vadd.f32 0.0, %v909
      %v911 = vpop.f32.mrb[0].mxu0
      %v912 = vpop.f32.mrb[0].mxu0
      %913 = vdwg.mxu0
      %914 = vmatprep.subr.bf16.mxu0 0
      %915 = vmatpush1.bf16.msra.mxu0 %v871
      %916 = vmatprep.subr.bf16.mxu0 0
      %917 = vmatpush1.bf16.msra.mxu0 0
      %918 = vmatprep.subr.bf16.mxu0 0
      %919 = vmatpush1.bf16.msra.mxu0 0
      %920 = vmatprep.subr.bf16.mxu0 0
      %921 = vmatpush1.bf16.msra.mxu0 0
      %922 = vmatprep.subr.bf16.mxu0 0
      %923 = vmatpush1.bf16.msra.mxu0 0
      %924 = vmatprep.subr.bf16.mxu0 0
      %925 = vmatpush1.bf16.msra.mxu0 0
      %926 = vmatprep.subr.bf16.mxu0 0
      %927 = vmatpush1.bf16.msra.mxu0 0
      %928 = vmatprep.subr.bf16.mxu0 0
      %929 = vmatpush1.bf16.msra.mxu0 0
      %930 = vmatprep.subr.bf16.mxu0 0
      %931 = vmatpush1.bf16.msra.mxu0 0
      %932 = vmatprep.subr.bf16.mxu0 0
      %933 = vmatpush1.bf16.msra.mxu0 0
      %934 = vmatprep.subr.bf16.mxu0 0
      %935 = vmatpush1.bf16.msra.mxu0 0
      %936 = vmatprep.subr.bf16.mxu0 0
      %937 = vmatpush1.bf16.msra.mxu0 0
      %938 = vmatprep.subr.bf16.mxu0 0
      %939 = vmatpush1.bf16.msra.mxu0 0
      %940 = vmatprep.subr.bf16.mxu0 0
      %941 = vmatpush1.bf16.msra.mxu0 0
      %942 = vmatprep.subr.bf16.mxu0 0
      %943 = vmatpush1.bf16.msra.mxu0 0
      %944 = vmatprep.subr.bf16.mxu0 0
      %945 = vmatpush1.bf16.msra.mxu0 0
      %946 = vmatprep.mubr.bf16.mxu0 0
      %947 = vmatmul.mubr.bf16.gmra.mrb[0].mxu0 %v862
      %v948 = vpop.f32.mrb[0].mxu0
      %v949 = vadd.f32 0.0, %v948
      %v950 = vpop.f32.mrb[0].mxu0
      %v951 = vpop.f32.mrb[0].mxu0
      %v952 = vpop.f32.mrb[0].mxu0
      %953 = vdwg.mxu0
      %v954 = vadd.f32 %v825, %v908
      %v955 = vadd.f32 %v826, %v910
      %v956 = vadd.f32 %v827, %v949
      %v957 = vld [vmem:[%s192] sm:$0xff]
      %s958 = scalar_lea.vmem %s1, 24
      %v959 = vld [vmem:[%s958] sm:$0xf]
      %v961 = vcombine.high %v957, %v957
      %v963 = vunpack.c.l.s4 1983009808
      %v964 = vunpack.c.0.s8 %v963
      %v965 = vlaneseq
      %v966 = vshrl.u32 %v965, 7
      %v967 = vsub.s32 %v964, %v966
      %v968 = vrot.slane %v957, %v967
      %v970 = vunpack.c.l.s4 1983009808
      %v971 = vunpack.c.0.s8 %v970
      %v972 = vlaneseq
      %v973 = vshrl.u32 %v972, 7
      %v974 = vsub.s32 %v971, %v973
      %v975 = vrot.slane %v961, %v974
      %v976 = vcombine.high %v968, %v968
      %v977 = vcombine.high %v975, %v975
      %978 = vrot.lane.b32.xlu0 %v968, 48
      %v979 = vpop.permute.xlu0 %978
      %980 = vrot.lane.b32.xlu0 %v976, 48
      %v981 = vpop.permute.xlu0 %980
      %982 = vrot.lane.b32.xlu0 %v975, 48
      %v983 = vpop.permute.xlu0 %982
      %984 = vrot.lane.b32.xlu0 %v977, 48
      %v985 = vpop.permute.xlu0 %984
      %vm986 = vcmask 392192
      %v987 = vsel %vm986, %v979, %v981
      %v988 = vsel %vm986, %v981, %v983
      %v989 = vsel %vm986, %v983, %v985
      %v991 = vsel %vm236, %v959, 0
      %v994 = vsel %vm240, %v987, 0
      %v997 = vsel %vm240, %v988, 0
      %v1000 = vsel %vm240, %v989, 0
      %1002 = vmatprep.subr.bf16.mxu0 %v997
      %1003 = vmatpush1.bf16.msra.mxu0 %v994
      %1004 = vmatprep.subr.bf16.mxu0 0
      %1005 = vmatpush1.bf16.msra.mxu0 0
      %1006 = vmatprep.subr.bf16.mxu0 0
      %1007 = vmatpush1.bf16.msra.mxu0 0
      %1008 = vmatprep.subr.bf16.mxu0 0
      %1009 = vmatpush1.bf16.msra.mxu0 0
      %1010 = vmatprep.subr.bf16.mxu0 0
      %1011 = vmatpush1.bf16.msra.mxu0 0
      %1012 = vmatprep.subr.bf16.mxu0 0
      %1013 = vmatpush1.bf16.msra.mxu0 0
      %1014 = vmatprep.subr.bf16.mxu0 0
      %1015 = vmatpush1.bf16.msra.mxu0 0
      %1016 = vmatprep.subr.bf16.mxu0 0
      %1017 = vmatpush1.bf16.msra.mxu0 0
      %1018 = vmatprep.subr.bf16.mxu0 0
      %1019 = vmatpush1.bf16.msra.mxu0 0
      %1020 = vmatprep.subr.bf16.mxu0 0
      %1021 = vmatpush1.bf16.msra.mxu0 0
      %1022 = vmatprep.subr.bf16.mxu0 0
      %1023 = vmatpush1.bf16.msra.mxu0 0
      %1024 = vmatprep.subr.bf16.mxu0 0
      %1025 = vmatpush1.bf16.msra.mxu0 0
      %1026 = vmatprep.subr.bf16.mxu0 0
      %1027 = vmatpush1.bf16.msra.mxu0 0
      %1028 = vmatprep.subr.bf16.mxu0 0
      %1029 = vmatpush1.bf16.msra.mxu0 0
      %1030 = vmatprep.subr.bf16.mxu0 0
      %1031 = vmatpush1.bf16.msra.mxu0 0
      %1032 = vmatprep.subr.bf16.mxu0 0
      %1033 = vmatpush1.bf16.msra.mxu0 0
      %1034 = vmatprep.mubr.bf16.mxu0 0
      %1035 = vmatmul.mubr.bf16.gmra.mrb[0].mxu0 %v991
      %v1036 = vpop.f32.mrb[0].mxu0
      %v1037 = vadd.f32 0.0, %v1036
      %v1038 = vpop.f32.mrb[0].mxu0
      %v1039 = vadd.f32 0.0, %v1038
      %v1040 = vpop.f32.mrb[0].mxu0
      %v1041 = vpop.f32.mrb[0].mxu0
      %1042 = vdwg.mxu0
      %1043 = vmatprep.subr.bf16.mxu0 0
      %1044 = vmatpush1.bf16.msra.mxu0 %v1000
      %1045 = vmatprep.subr.bf16.mxu0 0
      %1046 = vmatpush1.bf16.msra.mxu0 0
      %1047 = vmatprep.subr.bf16.mxu0 0
      %1048 = vmatpush1.bf16.msra.mxu0 0
      %1049 = vmatprep.subr.bf16.mxu0 0
      %1050 = vmatpush1.bf16.msra.mxu0 0
      %1051 = vmatprep.subr.bf16.mxu0 0
      %1052 = vmatpush1.bf16.msra.mxu0 0
      %1053 = vmatprep.subr.bf16.mxu0 0
      %1054 = vmatpush1.bf16.msra.mxu0 0
      %1055 = vmatprep.subr.bf16.mxu0 0
      %1056 = vmatpush1.bf16.msra.mxu0 0
      %1057 = vmatprep.subr.bf16.mxu0 0
      %1058 = vmatpush1.bf16.msra.mxu0 0
      %1059 = vmatprep.subr.bf16.mxu0 0
      %1060 = vmatpush1.bf16.msra.mxu0 0
      %1061 = vmatprep.subr.bf16.mxu0 0
      %1062 = vmatpush1.bf16.msra.mxu0 0
      %1063 = vmatprep.subr.bf16.mxu0 0
      %1064 = vmatpush1.bf16.msra.mxu0 0
      %1065 = vmatprep.subr.bf16.mxu0 0
      %1066 = vmatpush1.bf16.msra.mxu0 0
      %1067 = vmatprep.subr.bf16.mxu0 0
      %1068 = vmatpush1.bf16.msra.mxu0 0
      %1069 = vmatprep.subr.bf16.mxu0 0
      %1070 = vmatpush1.bf16.msra.mxu0 0
      %1071 = vmatprep.subr.bf16.mxu0 0
      %1072 = vmatpush1.bf16.msra.mxu0 0
      %1073 = vmatprep.subr.bf16.mxu0 0
      %1074 = vmatpush1.bf16.msra.mxu0 0
      %1075 = vmatprep.mubr.bf16.mxu0 0
      %1076 = vmatmul.mubr.bf16.gmra.mrb[0].mxu0 %v991
      %v1077 = vpop.f32.mrb[0].mxu0
      %v1078 = vadd.f32 0.0, %v1077
      %v1079 = vpop.f32.mrb[0].mxu0
      %v1080 = vpop.f32.mrb[0].mxu0
      %v1081 = vpop.f32.mrb[0].mxu0
      %1082 = vdwg.mxu0
      %v1083 = vadd.f32 %v954, %v1037
      %v1084 = vadd.f32 %v955, %v1039
      %v1085 = vadd.f32 %v956, %v1078
      %v1086 = vld [vmem:[%s192] sm:$0xff]
      %s1087 = scalar_lea.vmem %s1, 28
      %v1088 = vld [vmem:[%s1087] sm:$0xf]
      %v1090 = vcombine.high %v1086, %v1086
      %v1092 = vunpack.c.l.s4 1983009808
      %v1093 = vunpack.c.0.s8 %v1092
      %v1094 = vlaneseq
      %v1095 = vshrl.u32 %v1094, 7
      %v1096 = vsub.s32 %v1093, %v1095
      %v1097 = vrot.slane %v1086, %v1096
      %v1099 = vunpack.c.l.s4 1983009808
      %v1100 = vunpack.c.0.s8 %v1099
      %v1101 = vlaneseq
      %v1102 = vshrl.u32 %v1101, 7
      %v1103 = vsub.s32 %v1100, %v1102
      %v1104 = vrot.slane %v1090, %v1103
      %v1105 = vcombine.high %v1097, %v1097
      %v1106 = vcombine.high %v1104, %v1104
      %1107 = vrot.lane.b32.xlu0 %v1097, 46
      %v1108 = vpop.permute.xlu0 %1107
      %1109 = vrot.lane.b32.xlu0 %v1105, 46
      %v1110 = vpop.permute.xlu0 %1109
      %1111 = vrot.lane.b32.xlu0 %v1104, 46
      %v1112 = vpop.permute.xlu0 %1111
      %1113 = vrot.lane.b32.xlu0 %v1106, 46
      %v1114 = vpop.permute.xlu0 %1113
      %vm1115 = vcmask 375808
      %v1116 = vsel %vm1115, %v1108, %v1110
      %v1117 = vsel %vm1115, %v1110, %v1112
      %v1118 = vsel %vm1115, %v1112, %v1114
      %v1120 = vsel %vm236, %v1088, 0
      %v1123 = vsel %vm240, %v1116, 0
      %v1126 = vsel %vm240, %v1117, 0
      %v1129 = vsel %vm240, %v1118, 0
      %1131 = vmatprep.subr.bf16.mxu0 %v1126
      %1132 = vmatpush1.bf16.msra.mxu0 %v1123
      %1133 = vmatprep.subr.bf16.mxu0 0
      %1134 = vmatpush1.bf16.msra.mxu0 0
      %1135 = vmatprep.subr.bf16.mxu0 0
      %1136 = vmatpush1.bf16.msra.mxu0 0
      %1137 = vmatprep.subr.bf16.mxu0 0
      %1138 = vmatpush1.bf16.msra.mxu0 0
      %1139 = vmatprep.subr.bf16.mxu0 0
      %1140 = vmatpush1.bf16.msra.mxu0 0
      %1141 = vmatprep.subr.bf16.mxu0 0
      %1142 = vmatpush1.bf16.msra.mxu0 0
      %1143 = vmatprep.subr.bf16.mxu0 0
      %1144 = vmatpush1.bf16.msra.mxu0 0
      %1145 = vmatprep.subr.bf16.mxu0 0
      %1146 = vmatpush1.bf16.msra.mxu0 0
      %1147 = vmatprep.subr.bf16.mxu0 0
      %1148 = vmatpush1.bf16.msra.mxu0 0
      %1149 = vmatprep.subr.bf16.mxu0 0
      %1150 = vmatpush1.bf16.msra.mxu0 0
      %1151 = vmatprep.subr.bf16.mxu0 0
      %1152 = vmatpush1.bf16.msra.mxu0 0
      %1153 = vmatprep.subr.bf16.mxu0 0
      %1154 = vmatpush1.bf16.msra.mxu0 0
      %1155 = vmatprep.subr.bf16.mxu0 0
      %1156 = vmatpush1.bf16.msra.mxu0 0
      %1157 = vmatprep.subr.bf16.mxu0 0
      %1158 = vmatpush1.bf16.msra.mxu0 0
      %1159 = vmatprep.subr.bf16.mxu0 0
      %1160 = vmatpush1.bf16.msra.mxu0 0
      %1161 = vmatprep.subr.bf16.mxu0 0
      %1162 = vmatpush1.bf16.msra.mxu0 0
      %1163 = vmatprep.mubr.bf16.mxu0 0
      %1164 = vmatmul.mubr.bf16.gmra.mrb[0].mxu0 %v1120
      %v1165 = vpop.f32.mrb[0].mxu0
      %v1166 = vadd.f32 0.0, %v1165
      %v1167 = vpop.f32.mrb[0].mxu0
      %v1168 = vadd.f32 0.0, %v1167
      %v1169 = vpop.f32.mrb[0].mxu0
      %v1170 = vpop.f32.mrb[0].mxu0
      %1171 = vdwg.mxu0
      %1172 = vmatprep.subr.bf16.mxu0 0
      %1173 = vmatpush1.bf16.msra.mxu0 %v1129
      %1174 = vmatprep.subr.bf16.mxu0 0
      %1175 = vmatpush1.bf16.msra.mxu0 0
      %1176 = vmatprep.subr.bf16.mxu0 0
      %1177 = vmatpush1.bf16.msra.mxu0 0
      %1178 = vmatprep.subr.bf16.mxu0 0
      %1179 = vmatpush1.bf16.msra.mxu0 0
      %1180 = vmatprep.subr.bf16.mxu0 0
      %1181 = vmatpush1.bf16.msra.mxu0 0
      %1182 = vmatprep.subr.bf16.mxu0 0
      %1183 = vmatpush1.bf16.msra.mxu0 0
      %1184 = vmatprep.subr.bf16.mxu0 0
      %1185 = vmatpush1.bf16.msra.mxu0 0
      %1186 = vmatprep.subr.bf16.mxu0 0
      %1187 = vmatpush1.bf16.msra.mxu0 0
      %1188 = vmatprep.subr.bf16.mxu0 0
      %1189 = vmatpush1.bf16.msra.mxu0 0
      %1190 = vmatprep.subr.bf16.mxu0 0
      %1191 = vmatpush1.bf16.msra.mxu0 0
      %1192 = vmatprep.subr.bf16.mxu0 0
      %1193 = vmatpush1.bf16.msra.mxu0 0
      %1194 = vmatprep.subr.bf16.mxu0 0
      %1195 = vmatpush1.bf16.msra.mxu0 0
      %1196 = vmatprep.subr.bf16.mxu0 0
      %1197 = vmatpush1.bf16.msra.mxu0 0
      %1198 = vmatprep.subr.bf16.mxu0 0
      %1199 = vmatpush1.bf16.msra.mxu0 0
      %1200 = vmatprep.subr.bf16.mxu0 0
      %1201 = vmatpush1.bf16.msra.mxu0 0
      %1202 = vmatprep.subr.bf16.mxu0 0
      %1203 = vmatpush1.bf16.msra.mxu0 0
      %1204 = vmatprep.mubr.bf16.mxu0 0
      %1205 = vmatmul.mubr.bf16.gmra.mrb[0].mxu0 %v1120
      %v1206 = vpop.f32.mrb[0].mxu0
      %v1207 = vadd.f32 0.0, %v1206
      %v1208 = vpop.f32.mrb[0].mxu0
      %v1209 = vpop.f32.mrb[0].mxu0
      %v1210 = vpop.f32.mrb[0].mxu0
      %1211 = vdwg.mxu0
      %v1212 = vadd.f32 %v1083, %v1166
      %v1213 = vadd.f32 %v1084, %v1168
      %v1214 = vadd.f32 %v1085, %v1207
      %v1215 = vld [vmem:[%s192] sm:$0xff]
      %s1216 = scalar_lea.vmem %s1, 32
      %v1217 = vld [vmem:[%s1216] sm:$0xf]
      %v1219 = vcombine.high %v1215, %v1215
      %v1221 = vunpack.c.l.s4 1983009808
      %v1222 = vunpack.c.0.s8 %v1221
      %v1223 = vlaneseq
      %v1224 = vshrl.u32 %v1223, 7
      %v1225 = vsub.s32 %v1222, %v1224
      %v1226 = vrot.slane %v1215, %v1225
      %v1228 = vunpack.c.l.s4 1983009808
      %v1229 = vunpack.c.0.s8 %v1228
      %v1230 = vlaneseq
      %v1231 = vshrl.u32 %v1230, 7
      %v1232 = vsub.s32 %v1229, %v1231
      %v1233 = vrot.slane %v1219, %v1232
      %v1234 = vcombine.high %v1226, %v1226
      %v1235 = vcombine.high %v1233, %v1233
      %1236 = vrot.lane.b32.xlu0 %v1226, 44
      %v1237 = vpop.permute.xlu0 %1236
      %1238 = vrot.lane.b32.xlu0 %v1234, 44
      %v1239 = vpop.permute.xlu0 %1238
      %1240 = vrot.lane.b32.xlu0 %v1233, 44
      %v1241 = vpop.permute.xlu0 %1240
      %1242 = vrot.lane.b32.xlu0 %v1235, 44
      %v1243 = vpop.permute.xlu0 %1242
      %vm1244 = vcmask 359424
      %v1245 = vsel %vm1244, %v1237, %v1239
      %v1246 = vsel %vm1244, %v1239, %v1241
      %v1247 = vsel %vm1244, %v1241, %v1243
      %v1249 = vsel %vm236, %v1217, 0
      %v1252 = vsel %vm240, %v1245, 0
      %v1255 = vsel %vm240, %v1246, 0
      %v1258 = vsel %vm240, %v1247, 0
      %1260 = vmatprep.subr.bf16.mxu0 %v1255
      %1261 = vmatpush1.bf16.msra.mxu0 %v1252
      %1262 = vmatprep.subr.bf16.mxu0 0
      %1263 = vmatpush1.bf16.msra.mxu0 0
      %1264 = vmatprep.subr.bf16.mxu0 0
      %1265 = vmatpush1.bf16.msra.mxu0 0
      %1266 = vmatprep.subr.bf16.mxu0 0
      %1267 = vmatpush1.bf16.msra.mxu0 0
      %1268 = vmatprep.subr.bf16.mxu0 0
      %1269 = vmatpush1.bf16.msra.mxu0 0
      %1270 = vmatprep.subr.bf16.mxu0 0
      %1271 = vmatpush1.bf16.msra.mxu0 0
      %1272 = vmatprep.subr.bf16.mxu0 0
      %1273 = vmatpush1.bf16.msra.mxu0 0
      %1274 = vmatprep.subr.bf16.mxu0 0
      %1275 = vmatpush1.bf16.msra.mxu0 0
      %1276 = vmatprep.subr.bf16.mxu0 0
      %1277 = vmatpush1.bf16.msra.mxu0 0
      %1278 = vmatprep.subr.bf16.mxu0 0
      %1279 = vmatpush1.bf16.msra.mxu0 0
      %1280 = vmatprep.subr.bf16.mxu0 0
      %1281 = vmatpush1.bf16.msra.mxu0 0
      %1282 = vmatprep.subr.bf16.mxu0 0
      %1283 = vmatpush1.bf16.msra.mxu0 0
      %1284 = vmatprep.subr.bf16.mxu0 0
      %1285 = vmatpush1.bf16.msra.mxu0 0
      %1286 = vmatprep.subr.bf16.mxu0 0
      %1287 = vmatpush1.bf16.msra.mxu0 0
      %1288 = vmatprep.subr.bf16.mxu0 0
      %1289 = vmatpush1.bf16.msra.mxu0 0
      %1290 = vmatprep.subr.bf16.mxu0 0
      %1291 = vmatpush1.bf16.msra.mxu0 0
      %1292 = vmatprep.mubr.bf16.mxu0 0
      %1293 = vmatmul.mubr.bf16.gmra.mrb[0].mxu0 %v1249
      %v1294 = vpop.f32.mrb[0].mxu0
      %v1295 = vadd.f32 0.0, %v1294
      %v1296 = vpop.f32.mrb[0].mxu0
      %v1297 = vadd.f32 0.0, %v1296
      %v1298 = vpop.f32.mrb[0].mxu0
      %v1299 = vpop.f32.mrb[0].mxu0
      %1300 = vdwg.mxu0
      %1301 = vmatprep.subr.bf16.mxu0 0
      %1302 = vmatpush1.bf16.msra.mxu0 %v1258
      %1303 = vmatprep.subr.bf16.mxu0 0
      %1304 = vmatpush1.bf16.msra.mxu0 0
      %1305 = vmatprep.subr.bf16.mxu0 0
      %1306 = vmatpush1.bf16.msra.mxu0 0
      %1307 = vmatprep.subr.bf16.mxu0 0
      %1308 = vmatpush1.bf16.msra.mxu0 0
      %1309 = vmatprep.subr.bf16.mxu0 0
      %1310 = vmatpush1.bf16.msra.mxu0 0
      %1311 = vmatprep.subr.bf16.mxu0 0
      %1312 = vmatpush1.bf16.msra.mxu0 0
      %1313 = vmatprep.subr.bf16.mxu0 0
      %1314 = vmatpush1.bf16.msra.mxu0 0
      %1315 = vmatprep.subr.bf16.mxu0 0
      %1316 = vmatpush1.bf16.msra.mxu0 0
      %1317 = vmatprep.subr.bf16.mxu0 0
      %1318 = vmatpush1.bf16.msra.mxu0 0
      %1319 = vmatprep.subr.bf16.mxu0 0
      %1320 = vmatpush1.bf16.msra.mxu0 0
      %1321 = vmatprep.subr.bf16.mxu0 0
      %1322 = vmatpush1.bf16.msra.mxu0 0
      %1323 = vmatprep.subr.bf16.mxu0 0
      %1324 = vmatpush1.bf16.msra.mxu0 0
      %1325 = vmatprep.subr.bf16.mxu0 0
      %1326 = vmatpush1.bf16.msra.mxu0 0
      %1327 = vmatprep.subr.bf16.mxu0 0
      %1328 = vmatpush1.bf16.msra.mxu0 0
      %1329 = vmatprep.subr.bf16.mxu0 0
      %1330 = vmatpush1.bf16.msra.mxu0 0
      %1331 = vmatprep.subr.bf16.mxu0 0
      %1332 = vmatpush1.bf16.msra.mxu0 0
      %1333 = vmatprep.mubr.bf16.mxu0 0
      %1334 = vmatmul.mubr.bf16.gmra.mrb[0].mxu0 %v1249
      %v1335 = vpop.f32.mrb[0].mxu0
      %v1336 = vadd.f32 0.0, %v1335
      %v1337 = vpop.f32.mrb[0].mxu0
      %v1338 = vpop.f32.mrb[0].mxu0
      %v1339 = vpop.f32.mrb[0].mxu0
      %1340 = vdwg.mxu0
      %v1341 = vadd.f32 %v1212, %v1295
      %v1342 = vadd.f32 %v1213, %v1297
      %v1343 = vadd.f32 %v1214, %v1336
      %1345 = vset.pattern.permute.xlu0 0
      %1346 = vperm.xlu0 %1345, %v199
      %v1347 = vpop.permute.xlu0 %1346
      %v1349 = vmul.f32 %v1341, %v1347
      %v1350 = vmul.f32 %v1342, %v1347
      %v1351 = vmul.f32 %v1343, %v1347
      %1353 = vset.pattern.permute.xlu0 0
      %1354 = vperm.xlu0 %1353, %v200
      %v1355 = vpop.permute.xlu0 %1354
      %v1357 = vadd.f32 %v1349, %v1355
      %v1358 = vadd.f32 %v1350, %v1355
      %v1359 = vadd.f32 %v1351, %v1355
      %v1360 = vmax.f32 %v1357, 0.0
      %v1361 = vmax.f32 %v1358, 0.0
      %v1362 = vmax.f32 %v1359, 0.0
      %1363 = vst [vmem:[%s197] sm:$0xff] %v1360
      %1364 = vst [vmem:[%s197 + $0x8] sm:$0xff] %v1361
      %1365 = vst [vmem:[%s197 + $0x10] sm:$0xff] %v1362
      %p1366 = scmp.lt.s32.totalorder %s15, 1
      %s1367 = scalar_select %p1366, %s15, 1
      %s1368 = smul.addr %s1367, 3
      %s1369 = smul.addr %s1368, 8
      %s1370 = scalar_lea.vmem %s4, %s1369
      // Predicated region
      $region37: #{aspp_forward.1} parent=35 // pred_check
        %p1371 = pneg %p122
      $region38: #{aspp_forward.1} parent=35 // pred_check_branch
        %1373 = sbr.rel (%p1371) target = $region40
      $region39: #{aspp_forward.1} parent=35 // pred_region
        _
      $region40: #{aspp_forward.1} parent=35 // pred_fallthru
        _
    $region36: #{aspp_forward.1} parent=5 // pred_fallthru
      _
    %p1374 = scmp.le.s32.totalorder 2, %s10
    // Predicated region
    $region41: #{aspp_forward.1} parent=5 // pred_check
      %p1375 = pneg %p1374
    $region42: #{aspp_forward.1} parent=5 // pred_check_branch
      %1377 = sbr.rel (%p1375) target = $region44
    $region43: #{aspp_forward.1} parent=5 // pred_region
      %s1378 = ssub.s32 %s10, 2
      // Predicated region
      $region45: #{aspp_forward.1} parent=43 // pred_check
        %p1379 = pneg %p128
      $region46: #{aspp_forward.1} parent=43 // pred_check_branch
        %1381 = sbr.rel (%p1379) target = $region48
      $region47: #{aspp_forward.1} parent=43 // pred_region
        %p1382 = scmp.lt.s32.totalorder %s16, 1
        %s1383 = scalar_select %p1382, %s16, 1
        %s1384 = smul.addr %s1383, 3
        %s1385 = smul.addr %s1384, 8
        %s1386 = scalar_lea.vmem %s4, %s1385
      $region48: #{aspp_forward.1} parent=43 // pred_fallthru
        _
    $region44: #{aspp_forward.1} parent=5 // pred_fallthru
      _
  $region6: #{aspp_forward.1} parent=0 // loop_footer
    %s14 = sadd.s32 1, %s10
  $region7: #{aspp_forward.1} parent=0 // loop_footer_branch
    %9 = sbr.rel target = $region3
  $region8: #{aspp_forward.1} parent=0 // loop_exit
    _

</llo_original>
